<compile_context>
chip_gen: v5e
topology: v5e:2x2
jax: 0.10.0
libtpu: 0.0.40
codegen_flags: <defaults>
</compile_context>

<pallas_src>
import functools

import jax
import jax.numpy as jnp
import numpy as np
from jax.experimental import pallas as pl
from jax.experimental.pallas import tpu as pltpu


def dmn4_kernel(q_ref, s_ref, o_ref, *, q, M_q, n_way, M_s, NM):
    """One batch element, all queries at once.

    q_ref: (1, q*M_q, c)  L2-normalized query local descriptors (bf16)
    s_ref: (1, c, NMp)    L2-normalized support descriptors, class-major along
                          the last axis; NM = n_way*M_s real columns, zero-padded
                          to NMp (multiple of 128 lanes)
    o_ref: (1, q, n_way)  DMN4 class scores (f32)
    """
    QM = q * M_q
    qf = q_ref[0]                       # (QM, c)   bf16
    sf = s_ref[0]                       # (c, NMp)  bf16
    NMp = sf.shape[-1]

    # Single fused MXU matmul over all queries / classes / support positions.
    sim = jnp.dot(qf, sf, preferred_element_type=jnp.float32)        # (QM, NMp) f32

    col = jax.lax.broadcasted_iota(jnp.int32, (QM, NMp), 1)
    sim_m = jnp.where(col < NM, sim, -jnp.inf)                        # mask pad lanes

    # Merged nearest support position (first-occurrence argmax over N*M_s).
    row_max = jnp.max(sim_m, axis=-1, keepdims=True)                  # (QM, 1)
    nearest = jnp.min(jnp.where(sim_m == row_max, col, NM),
                      axis=-1, keepdims=True)                         # (QM, 1) int32

    # Per-class max over support positions + running top-2 over classes.
    cls_iota = jax.lax.broadcasted_iota(jnp.int32, (QM, n_way), 1)
    sim_max = jnp.zeros((QM, n_way), jnp.float32)
    m1 = m2 = None
    for n in range(n_way):                                            # small static N
        mx = jnp.max(sim[:, n * M_s:(n + 1) * M_s], axis=-1, keepdims=True)
        sim_max = jnp.where(cls_iota == n, mx, sim_max)
        if n == 0:
            m1, m2 = mx, jnp.full_like(mx, -jnp.inf)
        else:
            m2 = jnp.maximum(m2, jnp.minimum(m1, mx))
            m1 = jnp.maximum(m1, mx)
    class_diff = m1 - m2                                              # (QM, 1) top1-top2

    onehot = nearest == col                                           # (QM, NMp)
    diffs_m = jnp.where(onehot, class_diff, 0.0)                      # (QM, NMp)

    # Per-query mutual-nearest-neighbor mask and class scores.
    qrow = jax.lax.broadcasted_iota(jnp.int32, (q, n_way), 0)
    mq_iota = jax.lax.broadcasted_iota(jnp.int32, (M_q, NMp), 0)
    row_iota = jax.lax.broadcasted_iota(jnp.int32, (M_q, 1), 0)
    qv = jnp.zeros((q, n_way), jnp.float32)
    for qi in range(q):                                               # static in-VMEM slices
        r0 = qi * M_q
        dm = diffs_m[r0:r0 + M_q]                                     # (M_q, NMp)
        oh = onehot[r0:r0 + M_q]                                      # (M_q, NMp)
        dmax = jnp.max(dm, axis=0, keepdims=True)                     # (1, NMp)
        darg = jnp.min(jnp.where(dm == dmax, mq_iota, M_q),
                       axis=0, keepdims=True)                         # (1, NMp) first argmax
        sel = jnp.sum(jnp.where(oh, darg, 0), axis=-1, keepdims=True)  # (M_q, 1) gather
        maskf = (sel == row_iota).astype(jnp.float32)                 # mutual-NN mask
        qv_i = jnp.sum(sim_max[r0:r0 + M_q] * maskf,
                       axis=0, keepdims=True)                         # (1, n_way)
        qv = jnp.where(qrow == qi, qv_i, qv)
    o_ref[0] = qv


def _preprocess(support_xf, query_xf, n_way, k_shot):
    """NCHW feature maps -> L2-normalized, channels-structured local descriptors.

    Returns:
      q_feat: (b, q*M_q, c)         bf16
      s_feat: (b, c, n_way*M_s)     bf16, class-major along last axis
    """
    b, q, c, h, w = query_xf.shape
    M_q, M_s = h * w, k_shot * h * w
    eps = 1e-12
    qf = query_xf.reshape(b, q, c, M_q).transpose(0, 1, 3, 2).astype(jnp.float32)
    qf = qf / jnp.maximum(jnp.linalg.norm(qf, axis=-1, keepdims=True), eps)
    qf = qf.reshape(b, q * M_q, c).astype(jnp.bfloat16)

    sf = (support_xf.reshape(b, n_way, k_shot, c, h, w)
          .transpose(0, 1, 3, 2, 4, 5).reshape(b, n_way, c, M_s)).astype(jnp.float32)
    sf = sf / jnp.maximum(jnp.linalg.norm(sf, axis=2, keepdims=True), eps)
    sf = sf.transpose(0, 2, 1, 3).reshape(b, c, n_way * M_s).astype(jnp.bfloat16)
    return qf, sf


def dmn4_query_value(support_xf, query_xf, n_way, k_shot):
    """Returns DMN4 class scores query_value of shape (b*q, n_way)."""
    assert n_way >= 2, "DMN4 top-2 class margin requires n_way >= 2"
    b, q, c, h, w = query_xf.shape
    assert support_xf.shape[1] == n_way * k_shot
    M_q, M_s = h * w, k_shot * h * w
    NM = n_way * M_s
    NMp = ((NM + 127) // 128) * 128          # lane-dense similarity columns

    q_feat, s_feat = _preprocess(support_xf, query_xf, n_way, k_shot)
    s_pad = jnp.pad(s_feat, ((0, 0), (0, 0), (0, NMp - NM)))

    kernel = functools.partial(dmn4_kernel, q=q, M_q=M_q, n_way=n_way,
                               M_s=M_s, NM=NM)
    out = pl.pallas_call(
        kernel,
        out_shape=jax.ShapeDtypeStruct((b, q, n_way), jnp.float32),
        grid=(b,),
        in_specs=[
            pl.BlockSpec((1, q * M_q, c), lambda bi: (bi, 0, 0)),
            pl.BlockSpec((1, c, NMp), lambda bi: (bi, 0, 0)),
        ],
        out_specs=pl.BlockSpec((1, q, n_way), lambda bi: (bi, 0, 0)),
        compiler_params=pltpu.CompilerParams(
            dimension_semantics=("parallel",)),   # 2-way batch axis: both v7x TCs get work
    )(q_feat, s_pad)
    return out.reshape(b * q, n_way)


def dmn4_forward(support_xf, support_y, query_xf, query_y, *,
                 n_way, k_shot, temperature, training=False):
    """Mirrors DMN4.forward. support_y is unused (class-major support assumed),
    as in the reference InnerproductSimilarity."""
    del support_y
    b, q = query_xf.shape[:2]
    query_value = dmn4_query_value(support_xf, query_xf, n_way, k_shot)  # (b*q, n_way)
    query_y = query_y.reshape(b * q)
    if training:
        # TODO(synk): nn.CrossEntropyLoss computed in plain JAX glue (not in-kernel).
        logits = query_value / temperature
        logp = jax.nn.log_softmax(logits, axis=-1)
        loss = -jnp.mean(jnp.take_along_axis(logp, query_y[:, None], axis=-1))
        return {'DMN4_loss': loss}
    predict = jnp.argmax(query_value, axis=1)
    rewards = [1 if int(predict[j]) == int(query_y[j]) else 0
               for j in range(query_y.shape[0])]
    return rewards


def dmn4_query_value_ref(support_xf, query_xf, n_way, k_shot):
    """Pure-JAX reference (transcription of the PyTorch code) operating on the
    same preprocessed (normalized, bf16-rounded) descriptors as the kernel."""
    b, q, c, h, w = query_xf.shape
    M_q, M_s = h * w, k_shot * h * w
    q_feat, s_feat = _preprocess(support_xf, query_xf, n_way, k_shot)
    qf = q_feat.astype(jnp.float32).reshape(b, q, M_q, c)
    sf = s_feat.astype(jnp.float32).reshape(b, c, n_way, M_s)
    simi = jnp.einsum('bqmc,bcns->bqnms', qf, sf)               # (b,q,N,M_q,M_s)
    sim_max = simi.max(-1)                                      # (b,q,N,M_q)
    merged = jnp.transpose(simi, (0, 1, 3, 2, 4)).reshape(b, q, M_q, n_way * M_s)
    query_nearest = jnp.argmax(merged, -1)                      # (b,q,M_q)
    top2 = jax.lax.top_k(jnp.transpose(sim_max, (0, 1, 3, 2)), 2)[0]
    class_diff = top2[..., 0] - top2[..., 1]                    # (b,q,M_q)
    onehot = jax.nn.one_hot(query_nearest, n_way * M_s)
    diffs_m = onehot * class_diff[..., None]
    diffs_max_nearest = jnp.argmax(diffs_m, axis=-2)            # (b,q,NM)
    sel = jnp.take_along_axis(diffs_max_nearest, query_nearest, axis=-1)
    mask = (sel == jnp.arange(M_q)[None, None, :])
    qv = (sim_max * mask[:, :, None, :].astype(sim_max.dtype)).sum(-1)
    return qv.reshape(b * q, n_way)


if __name__ == "__main__":
    n_way, k_shot = 3, 2
    b, c, h, w = 2, 32, 4, 4
    q = n_way * 2                      # 2 queries per class
    s = n_way * k_shot
    temperature = 2.0

    key = jax.random.PRNGKey(0)
    k1, k2, k3 = jax.random.split(key, 3)
    support_xf = jax.random.normal(k1, (b, s, c, h, w), jnp.float32)
    query_xf = jax.random.normal(k2, (b, q, c, h, w), jnp.float32)
    support_y = jnp.tile(jnp.repeat(jnp.arange(n_way), k_shot)[None, :], (b, 1))
    query_y = jax.random.randint(k3, (b, q), 0, n_way)

    qv = jax.block_until_ready(dmn4_query_value(support_xf, query_xf, n_way, k_shot))
    qv_ref = dmn4_query_value_ref(support_xf, query_xf, n_way, k_shot)
    np.testing.assert_allclose(np.asarray(qv), np.asarray(qv_ref), rtol=1e-3, atol=1e-3)

    rewards = dmn4_forward(support_xf, support_y, query_xf, query_y,
                           n_way=n_way, k_shot=k_shot,
                           temperature=temperature, training=False)
    loss = dmn4_forward(support_xf, support_y, query_xf, query_y,
                        n_way=n_way, k_shot=k_shot,
                        temperature=temperature, training=True)['DMN4_loss']
    jax.block_until_ready(loss)
    assert len(rewards) == b * q
    print("KERNEL_OK")
</pallas_src>

<mosaic_0001>
module attributes {stable_mosaic.version = 11 : i64} {
  func.func @dmn4_kernel(%arg0: i32, %arg1: memref<1x96x32xbf16, #tpu.memory_space<vmem>>, %arg2: memref<1x32x128xbf16, #tpu.memory_space<vmem>>, %arg3: memref<1x6x3xf32, #tpu.memory_space<vmem>>) attributes {dimension_semantics = [#tpu.dimension_semantics<parallel>], iteration_bounds = array<i64: 2>, scalar_prefetch = 0 : i64, scratch_operands = 0 : i64, tpu.core_type = #tpu.core_type<tc>, window_params = [{transform_indices = @transform_0, window_bounds = array<i64: 1, 96, 32>}, {transform_indices = @transform_1, window_bounds = array<i64: 1, 32, 128>}, {transform_indices = @transform_2, window_bounds = array<i64: 1, 6, 3>}]} {
    %c0 = arith.constant 0 : index
    %c0_0 = arith.constant 0 : index
    %c0_1 = arith.constant 0 : index
    %0 = vector.load %arg1[%c0, %c0_0, %c0_1] : memref<1x96x32xbf16, #tpu.memory_space<vmem>>, vector<1x96x32xbf16>
    %1 = vector.shape_cast %0 : vector<1x96x32xbf16> to vector<96x32xbf16>
    %c0_2 = arith.constant 0 : index
    %c0_3 = arith.constant 0 : index
    %c0_4 = arith.constant 0 : index
    %2 = vector.load %arg2[%c0_2, %c0_3, %c0_4] : memref<1x32x128xbf16, #tpu.memory_space<vmem>>, vector<1x32x128xbf16>
    %3 = vector.shape_cast %2 : vector<1x32x128xbf16> to vector<32x128xbf16>
    %cst = arith.constant dense<0.000000e+00> : vector<96x128xf32>
    %4 = tpu.matmul %1, %3, %cst {dimension_numbers = #tpu.dot_dimension_numbers<[1], [0], [0], [1], [0, 0, 1, 1], [], []>} : vector<96x32xbf16>, vector<32x128xbf16>, vector<96x128xf32> -> vector<96x128xf32>
    %5 = tpu.iota {dimensions = array<i32: 1>} : vector<96x128xi32>
    %c96_i32 = arith.constant 96 : i32
    %6 = vector.broadcast %c96_i32 : i32 to vector<96x128xi32>
    %7 = arith.cmpi slt, %5, %6 : vector<96x128xi32>
    %cst_5 = arith.constant 0xFF800000 : f32
    %8 = vector.broadcast %cst_5 : f32 to vector<96x128xf32>
    %9 = arith.select %7, %4, %8 : vector<96x128xi1>, vector<96x128xf32>
    %cst_6 = arith.constant dense<0xFF800000> : vector<96xf32>
    %10 = vector.multi_reduction <maximumf>, %9, %cst_6 [1] : vector<96x128xf32> to vector<96xf32>
    %11 = vector.shape_cast %10 : vector<96xf32> to vector<96x1xf32>
    %12 = vector.broadcast %11 : vector<96x1xf32> to vector<96x128xf32>
    %13 = arith.cmpf oeq, %9, %12 : vector<96x128xf32>
    %c96_i32_7 = arith.constant 96 : i32
    %14 = vector.broadcast %c96_i32_7 : i32 to vector<96x128xi32>
    %15 = arith.select %13, %5, %14 : vector<96x128xi1>, vector<96x128xi32>
    %cst_8 = arith.constant dense<2147483647> : vector<96xi32>
    %16 = vector.multi_reduction <minsi>, %15, %cst_8 [1] : vector<96x128xi32> to vector<96xi32>
    %17 = vector.shape_cast %16 : vector<96xi32> to vector<96x1xi32>
    %18 = tpu.iota {dimensions = array<i32: 1>} : vector<96x3xi32>
    %cst_9 = arith.constant 0.000000e+00 : f32
    %19 = vector.broadcast %cst_9 : f32 to vector<96x3xf32>
    %20 = vector.extract_strided_slice %4 {offsets = [0, 0], sizes = [96, 32], strides = [1, 1]} : vector<96x128xf32> to vector<96x32xf32>
    %cst_10 = arith.constant dense<0xFF800000> : vector<96xf32>
    %21 = vector.multi_reduction <maximumf>, %20, %cst_10 [1] : vector<96x32xf32> to vector<96xf32>
    %22 = vector.shape_cast %21 : vector<96xf32> to vector<96x1xf32>
    %c0_i32 = arith.constant 0 : i32
    %23 = vector.broadcast %c0_i32 : i32 to vector<96x3xi32>
    %24 = arith.cmpi eq, %18, %23 : vector<96x3xi32>
    %25 = vector.shape_cast %22 : vector<96x1xf32> to vector<96x1xf32>
    %26 = vector.broadcast %25 : vector<96x1xf32> to vector<96x3xf32>
    %27 = arith.select %24, %26, %19 : vector<96x3xi1>, vector<96x3xf32>
    %cst_11 = arith.constant 0xFF800000 : f32
    %28 = vector.broadcast %cst_11 : f32 to vector<96x1xf32>
    %29 = vector.extract_strided_slice %4 {offsets = [0, 32], sizes = [96, 32], strides = [1, 1]} : vector<96x128xf32> to vector<96x32xf32>
    %cst_12 = arith.constant dense<0xFF800000> : vector<96xf32>
    %30 = vector.multi_reduction <maximumf>, %29, %cst_12 [1] : vector<96x32xf32> to vector<96xf32>
    %31 = vector.shape_cast %30 : vector<96xf32> to vector<96x1xf32>
    %c1_i32 = arith.constant 1 : i32
    %32 = vector.broadcast %c1_i32 : i32 to vector<96x3xi32>
    %33 = arith.cmpi eq, %18, %32 : vector<96x3xi32>
    %34 = vector.shape_cast %31 : vector<96x1xf32> to vector<96x1xf32>
    %35 = vector.broadcast %34 : vector<96x1xf32> to vector<96x3xf32>
    %36 = arith.select %33, %35, %27 : vector<96x3xi1>, vector<96x3xf32>
    %37 = arith.minimumf %22, %31 : vector<96x1xf32>
    %38 = arith.maximumf %28, %37 : vector<96x1xf32>
    %39 = arith.maximumf %22, %31 : vector<96x1xf32>
    %40 = vector.extract_strided_slice %4 {offsets = [0, 64], sizes = [96, 32], strides = [1, 1]} : vector<96x128xf32> to vector<96x32xf32>
    %cst_13 = arith.constant dense<0xFF800000> : vector<96xf32>
    %41 = vector.multi_reduction <maximumf>, %40, %cst_13 [1] : vector<96x32xf32> to vector<96xf32>
    %42 = vector.shape_cast %41 : vector<96xf32> to vector<96x1xf32>
    %c2_i32 = arith.constant 2 : i32
    %43 = vector.broadcast %c2_i32 : i32 to vector<96x3xi32>
    %44 = arith.cmpi eq, %18, %43 : vector<96x3xi32>
    %45 = vector.shape_cast %42 : vector<96x1xf32> to vector<96x1xf32>
    %46 = vector.broadcast %45 : vector<96x1xf32> to vector<96x3xf32>
    %47 = arith.select %44, %46, %36 : vector<96x3xi1>, vector<96x3xf32>
    %48 = arith.minimumf %39, %42 : vector<96x1xf32>
    %49 = arith.maximumf %38, %48 : vector<96x1xf32>
    %50 = arith.maximumf %39, %42 : vector<96x1xf32>
    %51 = arith.subf %50, %49 : vector<96x1xf32>
    %52 = vector.broadcast %17 : vector<96x1xi32> to vector<96x128xi32>
    %53 = arith.cmpi eq, %52, %5 : vector<96x128xi32>
    %cst_14 = arith.constant 0.000000e+00 : f32
    %54 = vector.shape_cast %51 : vector<96x1xf32> to vector<96x1xf32>
    %55 = vector.broadcast %54 : vector<96x1xf32> to vector<96x128xf32>
    %56 = vector.broadcast %cst_14 : f32 to vector<96x128xf32>
    %57 = arith.select %53, %55, %56 : vector<96x128xi1>, vector<96x128xf32>
    %58 = tpu.iota {dimensions = array<i32: 0>} : vector<6x3xi32>
    %59 = tpu.iota {dimensions = array<i32: 0>} : vector<16x128xi32>
    %60 = tpu.iota {dimensions = array<i32: 0>} : vector<16x1xi32>
    %cst_15 = arith.constant 0.000000e+00 : f32
    %61 = vector.broadcast %cst_15 : f32 to vector<6x3xf32>
    %62 = vector.extract_strided_slice %57 {offsets = [0, 0], sizes = [16, 128], strides = [1, 1]} : vector<96x128xf32> to vector<16x128xf32>
    %63 = vector.extract_strided_slice %53 {offsets = [0, 0], sizes = [16, 128], strides = [1, 1]} : vector<96x128xi1> to vector<16x128xi1>
    %cst_16 = arith.constant dense<0xFF800000> : vector<128xf32>
    %64 = vector.multi_reduction <maximumf>, %62, %cst_16 [0] : vector<16x128xf32> to vector<128xf32>
    %65 = vector.shape_cast %64 : vector<128xf32> to vector<1x128xf32>
    %66 = vector.broadcast %65 : vector<1x128xf32> to vector<16x128xf32>
    %67 = arith.cmpf oeq, %62, %66 : vector<16x128xf32>
    %c16_i32 = arith.constant 16 : i32
    %68 = vector.broadcast %c16_i32 : i32 to vector<16x128xi32>
    %69 = arith.select %67, %59, %68 : vector<16x128xi1>, vector<16x128xi32>
    %cst_17 = arith.constant dense<2147483647> : vector<128xi32>
    %70 = vector.multi_reduction <minsi>, %69, %cst_17 [0] : vector<16x128xi32> to vector<128xi32>
    %71 = vector.shape_cast %70 : vector<128xi32> to vector<1x128xi32>
    %c0_i32_18 = arith.constant 0 : i32
    %72 = vector.shape_cast %71 : vector<1x128xi32> to vector<1x128xi32>
    %73 = vector.broadcast %72 : vector<1x128xi32> to vector<16x128xi32>
    %74 = vector.broadcast %c0_i32_18 : i32 to vector<16x128xi32>
    %75 = arith.select %63, %73, %74 : vector<16x128xi1>, vector<16x128xi32>
    %cst_19 = arith.constant dense<0> : vector<16xi32>
    %76 = vector.multi_reduction <add>, %75, %cst_19 [1] : vector<16x128xi32> to vector<16xi32>
    %77 = vector.shape_cast %76 : vector<16xi32> to vector<16x1xi32>
    %78 = arith.cmpi eq, %77, %60 : vector<16x1xi32>
    %79 = arith.extui %78 : vector<16x1xi1> to vector<16x1xi32>
    %80 = arith.sitofp %79 : vector<16x1xi32> to vector<16x1xf32>
    %81 = vector.extract_strided_slice %47 {offsets = [0, 0], sizes = [16, 3], strides = [1, 1]} : vector<96x3xf32> to vector<16x3xf32>
    %82 = vector.broadcast %80 : vector<16x1xf32> to vector<16x3xf32>
    %83 = arith.mulf %81, %82 : vector<16x3xf32>
    %cst_20 = arith.constant dense<0.000000e+00> : vector<3xf32>
    %84 = vector.multi_reduction <add>, %83, %cst_20 [0] : vector<16x3xf32> to vector<3xf32>
    %85 = vector.shape_cast %84 : vector<3xf32> to vector<1x3xf32>
    %c0_i32_21 = arith.constant 0 : i32
    %86 = vector.broadcast %c0_i32_21 : i32 to vector<6x3xi32>
    %87 = arith.cmpi eq, %58, %86 : vector<6x3xi32>
    %88 = vector.shape_cast %85 : vector<1x3xf32> to vector<1x3xf32>
    %89 = vector.broadcast %88 : vector<1x3xf32> to vector<6x3xf32>
    %90 = arith.select %87, %89, %61 : vector<6x3xi1>, vector<6x3xf32>
    %91 = vector.extract_strided_slice %57 {offsets = [16, 0], sizes = [16, 128], strides = [1, 1]} : vector<96x128xf32> to vector<16x128xf32>
    %92 = vector.extract_strided_slice %53 {offsets = [16, 0], sizes = [16, 128], strides = [1, 1]} : vector<96x128xi1> to vector<16x128xi1>
    %cst_22 = arith.constant dense<0xFF800000> : vector<128xf32>
    %93 = vector.multi_reduction <maximumf>, %91, %cst_22 [0] : vector<16x128xf32> to vector<128xf32>
    %94 = vector.shape_cast %93 : vector<128xf32> to vector<1x128xf32>
    %95 = vector.broadcast %94 : vector<1x128xf32> to vector<16x128xf32>
    %96 = arith.cmpf oeq, %91, %95 : vector<16x128xf32>
    %c16_i32_23 = arith.constant 16 : i32
    %97 = vector.broadcast %c16_i32_23 : i32 to vector<16x128xi32>
    %98 = arith.select %96, %59, %97 : vector<16x128xi1>, vector<16x128xi32>
    %cst_24 = arith.constant dense<2147483647> : vector<128xi32>
    %99 = vector.multi_reduction <minsi>, %98, %cst_24 [0] : vector<16x128xi32> to vector<128xi32>
    %100 = vector.shape_cast %99 : vector<128xi32> to vector<1x128xi32>
    %c0_i32_25 = arith.constant 0 : i32
    %101 = vector.shape_cast %100 : vector<1x128xi32> to vector<1x128xi32>
    %102 = vector.broadcast %101 : vector<1x128xi32> to vector<16x128xi32>
    %103 = vector.broadcast %c0_i32_25 : i32 to vector<16x128xi32>
    %104 = arith.select %92, %102, %103 : vector<16x128xi1>, vector<16x128xi32>
    %cst_26 = arith.constant dense<0> : vector<16xi32>
    %105 = vector.multi_reduction <add>, %104, %cst_26 [1] : vector<16x128xi32> to vector<16xi32>
    %106 = vector.shape_cast %105 : vector<16xi32> to vector<16x1xi32>
    %107 = arith.cmpi eq, %106, %60 : vector<16x1xi32>
    %108 = arith.extui %107 : vector<16x1xi1> to vector<16x1xi32>
    %109 = arith.sitofp %108 : vector<16x1xi32> to vector<16x1xf32>
    %110 = vector.extract_strided_slice %47 {offsets = [16, 0], sizes = [16, 3], strides = [1, 1]} : vector<96x3xf32> to vector<16x3xf32>
    %111 = vector.broadcast %109 : vector<16x1xf32> to vector<16x3xf32>
    %112 = arith.mulf %110, %111 : vector<16x3xf32>
    %cst_27 = arith.constant dense<0.000000e+00> : vector<3xf32>
    %113 = vector.multi_reduction <add>, %112, %cst_27 [0] : vector<16x3xf32> to vector<3xf32>
    %114 = vector.shape_cast %113 : vector<3xf32> to vector<1x3xf32>
    %c1_i32_28 = arith.constant 1 : i32
    %115 = vector.broadcast %c1_i32_28 : i32 to vector<6x3xi32>
    %116 = arith.cmpi eq, %58, %115 : vector<6x3xi32>
    %117 = vector.shape_cast %114 : vector<1x3xf32> to vector<1x3xf32>
    %118 = vector.broadcast %117 : vector<1x3xf32> to vector<6x3xf32>
    %119 = arith.select %116, %118, %90 : vector<6x3xi1>, vector<6x3xf32>
    %120 = vector.extract_strided_slice %57 {offsets = [32, 0], sizes = [16, 128], strides = [1, 1]} : vector<96x128xf32> to vector<16x128xf32>
    %121 = vector.extract_strided_slice %53 {offsets = [32, 0], sizes = [16, 128], strides = [1, 1]} : vector<96x128xi1> to vector<16x128xi1>
    %cst_29 = arith.constant dense<0xFF800000> : vector<128xf32>
    %122 = vector.multi_reduction <maximumf>, %120, %cst_29 [0] : vector<16x128xf32> to vector<128xf32>
    %123 = vector.shape_cast %122 : vector<128xf32> to vector<1x128xf32>
    %124 = vector.broadcast %123 : vector<1x128xf32> to vector<16x128xf32>
    %125 = arith.cmpf oeq, %120, %124 : vector<16x128xf32>
    %c16_i32_30 = arith.constant 16 : i32
    %126 = vector.broadcast %c16_i32_30 : i32 to vector<16x128xi32>
    %127 = arith.select %125, %59, %126 : vector<16x128xi1>, vector<16x128xi32>
    %cst_31 = arith.constant dense<2147483647> : vector<128xi32>
    %128 = vector.multi_reduction <minsi>, %127, %cst_31 [0] : vector<16x128xi32> to vector<128xi32>
    %129 = vector.shape_cast %128 : vector<128xi32> to vector<1x128xi32>
    %c0_i32_32 = arith.constant 0 : i32
    %130 = vector.shape_cast %129 : vector<1x128xi32> to vector<1x128xi32>
    %131 = vector.broadcast %130 : vector<1x128xi32> to vector<16x128xi32>
    %132 = vector.broadcast %c0_i32_32 : i32 to vector<16x128xi32>
    %133 = arith.select %121, %131, %132 : vector<16x128xi1>, vector<16x128xi32>
    %cst_33 = arith.constant dense<0> : vector<16xi32>
    %134 = vector.multi_reduction <add>, %133, %cst_33 [1] : vector<16x128xi32> to vector<16xi32>
    %135 = vector.shape_cast %134 : vector<16xi32> to vector<16x1xi32>
    %136 = arith.cmpi eq, %135, %60 : vector<16x1xi32>
    %137 = arith.extui %136 : vector<16x1xi1> to vector<16x1xi32>
    %138 = arith.sitofp %137 : vector<16x1xi32> to vector<16x1xf32>
    %139 = vector.extract_strided_slice %47 {offsets = [32, 0], sizes = [16, 3], strides = [1, 1]} : vector<96x3xf32> to vector<16x3xf32>
    %140 = vector.broadcast %138 : vector<16x1xf32> to vector<16x3xf32>
    %141 = arith.mulf %139, %140 : vector<16x3xf32>
    %cst_34 = arith.constant dense<0.000000e+00> : vector<3xf32>
    %142 = vector.multi_reduction <add>, %141, %cst_34 [0] : vector<16x3xf32> to vector<3xf32>
    %143 = vector.shape_cast %142 : vector<3xf32> to vector<1x3xf32>
    %c2_i32_35 = arith.constant 2 : i32
    %144 = vector.broadcast %c2_i32_35 : i32 to vector<6x3xi32>
    %145 = arith.cmpi eq, %58, %144 : vector<6x3xi32>
    %146 = vector.shape_cast %143 : vector<1x3xf32> to vector<1x3xf32>
    %147 = vector.broadcast %146 : vector<1x3xf32> to vector<6x3xf32>
    %148 = arith.select %145, %147, %119 : vector<6x3xi1>, vector<6x3xf32>
    %149 = vector.extract_strided_slice %57 {offsets = [48, 0], sizes = [16, 128], strides = [1, 1]} : vector<96x128xf32> to vector<16x128xf32>
    %150 = vector.extract_strided_slice %53 {offsets = [48, 0], sizes = [16, 128], strides = [1, 1]} : vector<96x128xi1> to vector<16x128xi1>
    %cst_36 = arith.constant dense<0xFF800000> : vector<128xf32>
    %151 = vector.multi_reduction <maximumf>, %149, %cst_36 [0] : vector<16x128xf32> to vector<128xf32>
    %152 = vector.shape_cast %151 : vector<128xf32> to vector<1x128xf32>
    %153 = vector.broadcast %152 : vector<1x128xf32> to vector<16x128xf32>
    %154 = arith.cmpf oeq, %149, %153 : vector<16x128xf32>
    %c16_i32_37 = arith.constant 16 : i32
    %155 = vector.broadcast %c16_i32_37 : i32 to vector<16x128xi32>
    %156 = arith.select %154, %59, %155 : vector<16x128xi1>, vector<16x128xi32>
    %cst_38 = arith.constant dense<2147483647> : vector<128xi32>
    %157 = vector.multi_reduction <minsi>, %156, %cst_38 [0] : vector<16x128xi32> to vector<128xi32>
    %158 = vector.shape_cast %157 : vector<128xi32> to vector<1x128xi32>
    %c0_i32_39 = arith.constant 0 : i32
    %159 = vector.shape_cast %158 : vector<1x128xi32> to vector<1x128xi32>
    %160 = vector.broadcast %159 : vector<1x128xi32> to vector<16x128xi32>
    %161 = vector.broadcast %c0_i32_39 : i32 to vector<16x128xi32>
    %162 = arith.select %150, %160, %161 : vector<16x128xi1>, vector<16x128xi32>
    %cst_40 = arith.constant dense<0> : vector<16xi32>
    %163 = vector.multi_reduction <add>, %162, %cst_40 [1] : vector<16x128xi32> to vector<16xi32>
    %164 = vector.shape_cast %163 : vector<16xi32> to vector<16x1xi32>
    %165 = arith.cmpi eq, %164, %60 : vector<16x1xi32>
    %166 = arith.extui %165 : vector<16x1xi1> to vector<16x1xi32>
    %167 = arith.sitofp %166 : vector<16x1xi32> to vector<16x1xf32>
    %168 = vector.extract_strided_slice %47 {offsets = [48, 0], sizes = [16, 3], strides = [1, 1]} : vector<96x3xf32> to vector<16x3xf32>
    %169 = vector.broadcast %167 : vector<16x1xf32> to vector<16x3xf32>
    %170 = arith.mulf %168, %169 : vector<16x3xf32>
    %cst_41 = arith.constant dense<0.000000e+00> : vector<3xf32>
    %171 = vector.multi_reduction <add>, %170, %cst_41 [0] : vector<16x3xf32> to vector<3xf32>
    %172 = vector.shape_cast %171 : vector<3xf32> to vector<1x3xf32>
    %c3_i32 = arith.constant 3 : i32
    %173 = vector.broadcast %c3_i32 : i32 to vector<6x3xi32>
    %174 = arith.cmpi eq, %58, %173 : vector<6x3xi32>
    %175 = vector.shape_cast %172 : vector<1x3xf32> to vector<1x3xf32>
    %176 = vector.broadcast %175 : vector<1x3xf32> to vector<6x3xf32>
    %177 = arith.select %174, %176, %148 : vector<6x3xi1>, vector<6x3xf32>
    %178 = vector.extract_strided_slice %57 {offsets = [64, 0], sizes = [16, 128], strides = [1, 1]} : vector<96x128xf32> to vector<16x128xf32>
    %179 = vector.extract_strided_slice %53 {offsets = [64, 0], sizes = [16, 128], strides = [1, 1]} : vector<96x128xi1> to vector<16x128xi1>
    %cst_42 = arith.constant dense<0xFF800000> : vector<128xf32>
    %180 = vector.multi_reduction <maximumf>, %178, %cst_42 [0] : vector<16x128xf32> to vector<128xf32>
    %181 = vector.shape_cast %180 : vector<128xf32> to vector<1x128xf32>
    %182 = vector.broadcast %181 : vector<1x128xf32> to vector<16x128xf32>
    %183 = arith.cmpf oeq, %178, %182 : vector<16x128xf32>
    %c16_i32_43 = arith.constant 16 : i32
    %184 = vector.broadcast %c16_i32_43 : i32 to vector<16x128xi32>
    %185 = arith.select %183, %59, %184 : vector<16x128xi1>, vector<16x128xi32>
    %cst_44 = arith.constant dense<2147483647> : vector<128xi32>
    %186 = vector.multi_reduction <minsi>, %185, %cst_44 [0] : vector<16x128xi32> to vector<128xi32>
    %187 = vector.shape_cast %186 : vector<128xi32> to vector<1x128xi32>
    %c0_i32_45 = arith.constant 0 : i32
    %188 = vector.shape_cast %187 : vector<1x128xi32> to vector<1x128xi32>
    %189 = vector.broadcast %188 : vector<1x128xi32> to vector<16x128xi32>
    %190 = vector.broadcast %c0_i32_45 : i32 to vector<16x128xi32>
    %191 = arith.select %179, %189, %190 : vector<16x128xi1>, vector<16x128xi32>
    %cst_46 = arith.constant dense<0> : vector<16xi32>
    %192 = vector.multi_reduction <add>, %191, %cst_46 [1] : vector<16x128xi32> to vector<16xi32>
    %193 = vector.shape_cast %192 : vector<16xi32> to vector<16x1xi32>
    %194 = arith.cmpi eq, %193, %60 : vector<16x1xi32>
    %195 = arith.extui %194 : vector<16x1xi1> to vector<16x1xi32>
    %196 = arith.sitofp %195 : vector<16x1xi32> to vector<16x1xf32>
    %197 = vector.extract_strided_slice %47 {offsets = [64, 0], sizes = [16, 3], strides = [1, 1]} : vector<96x3xf32> to vector<16x3xf32>
    %198 = vector.broadcast %196 : vector<16x1xf32> to vector<16x3xf32>
    %199 = arith.mulf %197, %198 : vector<16x3xf32>
    %cst_47 = arith.constant dense<0.000000e+00> : vector<3xf32>
    %200 = vector.multi_reduction <add>, %199, %cst_47 [0] : vector<16x3xf32> to vector<3xf32>
    %201 = vector.shape_cast %200 : vector<3xf32> to vector<1x3xf32>
    %c4_i32 = arith.constant 4 : i32
    %202 = vector.broadcast %c4_i32 : i32 to vector<6x3xi32>
    %203 = arith.cmpi eq, %58, %202 : vector<6x3xi32>
    %204 = vector.shape_cast %201 : vector<1x3xf32> to vector<1x3xf32>
    %205 = vector.broadcast %204 : vector<1x3xf32> to vector<6x3xf32>
    %206 = arith.select %203, %205, %177 : vector<6x3xi1>, vector<6x3xf32>
    %207 = vector.extract_strided_slice %57 {offsets = [80, 0], sizes = [16, 128], strides = [1, 1]} : vector<96x128xf32> to vector<16x128xf32>
    %208 = vector.extract_strided_slice %53 {offsets = [80, 0], sizes = [16, 128], strides = [1, 1]} : vector<96x128xi1> to vector<16x128xi1>
    %cst_48 = arith.constant dense<0xFF800000> : vector<128xf32>
    %209 = vector.multi_reduction <maximumf>, %207, %cst_48 [0] : vector<16x128xf32> to vector<128xf32>
    %210 = vector.shape_cast %209 : vector<128xf32> to vector<1x128xf32>
    %211 = vector.broadcast %210 : vector<1x128xf32> to vector<16x128xf32>
    %212 = arith.cmpf oeq, %207, %211 : vector<16x128xf32>
    %c16_i32_49 = arith.constant 16 : i32
    %213 = vector.broadcast %c16_i32_49 : i32 to vector<16x128xi32>
    %214 = arith.select %212, %59, %213 : vector<16x128xi1>, vector<16x128xi32>
    %cst_50 = arith.constant dense<2147483647> : vector<128xi32>
    %215 = vector.multi_reduction <minsi>, %214, %cst_50 [0] : vector<16x128xi32> to vector<128xi32>
    %216 = vector.shape_cast %215 : vector<128xi32> to vector<1x128xi32>
    %c0_i32_51 = arith.constant 0 : i32
    %217 = vector.shape_cast %216 : vector<1x128xi32> to vector<1x128xi32>
    %218 = vector.broadcast %217 : vector<1x128xi32> to vector<16x128xi32>
    %219 = vector.broadcast %c0_i32_51 : i32 to vector<16x128xi32>
    %220 = arith.select %208, %218, %219 : vector<16x128xi1>, vector<16x128xi32>
    %cst_52 = arith.constant dense<0> : vector<16xi32>
    %221 = vector.multi_reduction <add>, %220, %cst_52 [1] : vector<16x128xi32> to vector<16xi32>
    %222 = vector.shape_cast %221 : vector<16xi32> to vector<16x1xi32>
    %223 = arith.cmpi eq, %222, %60 : vector<16x1xi32>
    %224 = arith.extui %223 : vector<16x1xi1> to vector<16x1xi32>
    %225 = arith.sitofp %224 : vector<16x1xi32> to vector<16x1xf32>
    %226 = vector.extract_strided_slice %47 {offsets = [80, 0], sizes = [16, 3], strides = [1, 1]} : vector<96x3xf32> to vector<16x3xf32>
    %227 = vector.broadcast %225 : vector<16x1xf32> to vector<16x3xf32>
    %228 = arith.mulf %226, %227 : vector<16x3xf32>
    %cst_53 = arith.constant dense<0.000000e+00> : vector<3xf32>
    %229 = vector.multi_reduction <add>, %228, %cst_53 [0] : vector<16x3xf32> to vector<3xf32>
    %230 = vector.shape_cast %229 : vector<3xf32> to vector<1x3xf32>
    %c5_i32 = arith.constant 5 : i32
    %231 = vector.broadcast %c5_i32 : i32 to vector<6x3xi32>
    %232 = arith.cmpi eq, %58, %231 : vector<6x3xi32>
    %233 = vector.shape_cast %230 : vector<1x3xf32> to vector<1x3xf32>
    %234 = vector.broadcast %233 : vector<1x3xf32> to vector<6x3xf32>
    %235 = arith.select %232, %234, %206 : vector<6x3xi1>, vector<6x3xf32>
    %c0_54 = arith.constant 0 : index
    %c0_55 = arith.constant 0 : index
    %c0_56 = arith.constant 0 : index
    %236 = vector.load %arg3[%c0_54, %c0_55, %c0_56] : memref<1x6x3xf32, #tpu.memory_space<vmem>>, vector<1x6x3xf32>
    %237 = vector.shape_cast %236 : vector<1x6x3xf32> to vector<6x3xf32>
    %238 = vector.shape_cast %235 : vector<6x3xf32> to vector<1x6x3xf32>
    tpu.vector_store %arg3[%c0_54, %c0_55, %c0_56], %238 {strides = array<i32>} : memref<1x6x3xf32, #tpu.memory_space<vmem>>, vector<1x6x3xf32>,
    return
  }
  func.func @transform_0(%arg0: i32) -> (i32, i32, i32) {
    %c0_i32 = arith.constant 0 : i32
    %c0_i32_0 = arith.constant 0 : i32
    %c0_i32_1 = arith.constant 0 : i32
    return %arg0, %c0_i32, %c0_i32_0 : i32, i32, i32
  }
  func.func @transform_1(%arg0: i32) -> (i32, i32, i32) {
    %c0_i32 = arith.constant 0 : i32
    %c0_i32_0 = arith.constant 0 : i32
    %c0_i32_1 = arith.constant 0 : i32
    return %arg0, %c0_i32, %c0_i32_0 : i32, i32, i32
  }
  func.func @transform_2(%arg0: i32) -> (i32, i32, i32) {
    %c0_i32 = arith.constant 0 : i32
    %c0_i32_0 = arith.constant 0 : i32
    %c0_i32_1 = arith.constant 0 : i32
    return %arg0, %c0_i32, %c0_i32_0 : i32, i32, i32
  }
}

</mosaic_0001>

<llo_original>
// kernel: tpu_custom_call.1
$region0: #{tpu_custom_call.1}
  #allocation0 [shape = 'u32[]', space=smem, size = 0x4, offset = 0x4, fixed_abs, tag = 'smem constant byte address 0x4 - core index']
  #allocation1 [shape = 'u32[72,128]{1,0:T(1,128)}', space=vmem, size = 0x9000, scoped, tag = 'internal scratch']
  %s0 = inlined_call_operand.vmem [shape: bf16[2,96,32], index: 0, kind: input, shape index: {}]
  %s1 = inlined_call_operand.vmem [shape: bf16[2,32,128], index: 1, kind: input, shape index: {}]
  %s2 = inlined_call_operand.vmem [shape: f32[2,6,3], index: 2, kind: output, shape index: {}]
  %s3 = sld [smem:[#allocation0]]
  $region41: #{tpu_custom_call.1} parent=0
    _
  %s5 = ssub.s32 1, %s3
  %s6 = scalar_select 0, %s5, %s3
  loop: start=0, step=1, limit=4
  $region2: #{tpu_custom_call.1} parent=0 // loop_pre_header
    _
  $region3: #{tpu_custom_call.1} parent=0 // loop_header
    %s8 = sphi 0, %s12
    %p9 = scmp.ge.s32.totalorder %s8, 4
    %s18 = sphi 0, %s20
    %s21 = sphi 0, %s18
    %s22 = sphi 0, %s21
    %s38 = sphi 0, %s22
    %s44 = sphi 0, %s46
    %s47 = sphi 0, %s44
    %s48 = sphi 0, %s47
    %s64 = sphi 0, %s48
    %s70 = sphi 0, %s72
    %s73 = sphi 0, %s70
    %s74 = sphi 0, %s73
    %s90 = sphi 0, %s74
  $region4: #{tpu_custom_call.1} parent=0 // loop_header_branch
    %11 = sbr.rel (%p9) target = $region8
  $region5: #{tpu_custom_call.1} parent=0 // loop_body
    %s13 = ssub.s32 %s8, 1
    %s14 = ssub.s32 %s8, 2
    %s15 = sadd.s32 %s8, 1
    %s16 = ssub.s32 %s8, %s15
    %p17 = scmp.eq.s32.totalorder %s16, 0
    %s19 = sadd.s32 %s18, 1
    %s20 = scalar_select %p17, %s18, %s19
    %p23 = pneg %p17
    %p24 = scmp.eq.s32.totalorder %s8, 1
    %p25 = por %p23, %p24
    %p26 = scmp.ne.s32.totalorder %s18, %s21
    %p27 = scmp.eq.s32.totalorder %s8, 0
    %p28 = por %p26, %p27
    %p29 = scmp.ne.s32.totalorder %s18, %s21
    %p30 = scmp.eq.s32.totalorder %s13, 1
    %p31 = por %p29, %p30
    %p32 = scmp.ne.s32.totalorder %s21, %s22
    %p33 = scmp.eq.s32.totalorder %s13, 0
    %p34 = por %p32, %p33
    %p35 = scmp.ne.s32.totalorder %s21, %s22
    %p36 = scmp.eq.s32.totalorder %s14, 1
    %p37 = por %p35, %p36
    %p39 = scmp.ne.s32.totalorder %s22, %s38
    %p40 = scmp.eq.s32.totalorder %s14, 0
    %p41 = por %p39, %p40
    %s42 = ssub.s32 %s8, %s15
    %p43 = scmp.eq.s32.totalorder %s42, 0
    %s45 = sadd.s32 %s44, 1
    %s46 = scalar_select %p43, %s44, %s45
    %p49 = pneg %p43
    %p50 = scmp.eq.s32.totalorder %s8, 1
    %p51 = por %p49, %p50
    %p52 = scmp.ne.s32.totalorder %s44, %s47
    %p53 = scmp.eq.s32.totalorder %s8, 0
    %p54 = por %p52, %p53
    %p55 = scmp.ne.s32.totalorder %s44, %s47
    %p56 = scmp.eq.s32.totalorder %s13, 1
    %p57 = por %p55, %p56
    %p58 = scmp.ne.s32.totalorder %s47, %s48
    %p59 = scmp.eq.s32.totalorder %s13, 0
    %p60 = por %p58, %p59
    %p61 = scmp.ne.s32.totalorder %s47, %s48
    %p62 = scmp.eq.s32.totalorder %s14, 1
    %p63 = por %p61, %p62
    %p65 = scmp.ne.s32.totalorder %s48, %s64
    %p66 = scmp.eq.s32.totalorder %s14, 0
    %p67 = por %p65, %p66
    %s68 = ssub.s32 %s8, %s15
    %p69 = scmp.eq.s32.totalorder %s68, 0
    %s71 = sadd.s32 %s70, 1
    %s72 = scalar_select %p69, %s70, %s71
    %p75 = pneg %p69
    %p76 = scmp.eq.s32.totalorder %s8, 1
    %p77 = por %p75, %p76
    %p78 = scmp.ne.s32.totalorder %s70, %s73
    %p79 = scmp.eq.s32.totalorder %s8, 0
    %p80 = por %p78, %p79
    %p81 = scmp.ne.s32.totalorder %s70, %s73
    %p82 = scmp.eq.s32.totalorder %s13, 1
    %p83 = por %p81, %p82
    %p84 = scmp.ne.s32.totalorder %s73, %s74
    %p85 = scmp.eq.s32.totalorder %s13, 0
    %p86 = por %p84, %p85
    %p87 = scmp.ne.s32.totalorder %s73, %s74
    %p88 = scmp.eq.s32.totalorder %s14, 1
    %p89 = por %p87, %p88
    %p91 = scmp.ne.s32.totalorder %s74, %s90
    %p92 = scmp.eq.s32.totalorder %s14, 0
    %p93 = por %p91, %p92
    %p94 = scmp.le.s32.totalorder 1, %s8
    %p95 = scmp.lt.s32.totalorder %s8, 3
    %p96 = pnand %p94, %p95
    %p97 = pneg %p96
    // Predicated region
    $region9: #{tpu_custom_call.1} parent=5 // pred_check
      _
    $region10: #{tpu_custom_call.1} parent=5 // pred_check_branch
      %99 = sbr.rel (%p96) target = $region12
    $region11: #{tpu_custom_call.1} parent=5 // pred_region
      %s100 = ssub.s32 %s8, 1
    $region12: #{tpu_custom_call.1} parent=5 // pred_fallthru
      _
    %p101 = scmp.lt.s32.totalorder %s8, 2
    // Predicated region
    $region13: #{tpu_custom_call.1} parent=5 // pred_check
      %p102 = pneg %p101
    $region14: #{tpu_custom_call.1} parent=5 // pred_check_branch
      %104 = sbr.rel (%p102) target = $region16
    $region15: #{tpu_custom_call.1} parent=5 // pred_region
      // Predicated region
      $region17: #{tpu_custom_call.1} parent=15 // pred_check
        %p105 = pneg %p28
      $region18: #{tpu_custom_call.1} parent=15 // pred_check_branch
        %107 = sbr.rel (%p105) target = $region20
      $region19: #{tpu_custom_call.1} parent=15 // pred_region
        %p108 = scmp.lt.s32.totalorder %s8, 1
        %s109 = scalar_select %p108, %s8, 1
        %s110 = smul.addr %s109, 12
        %s111 = smul.addr %s110, 4
        %s112 = scalar_lea.vmem %s0, %s111
      $region20: #{tpu_custom_call.1} parent=15 // pred_fallthru
        _
      // Predicated region
      $region21: #{tpu_custom_call.1} parent=15 // pred_check
        %p113 = pneg %p54
      $region22: #{tpu_custom_call.1} parent=15 // pred_check_branch
        %115 = sbr.rel (%p113) target = $region24
      $region23: #{tpu_custom_call.1} parent=15 // pred_region
        %p116 = scmp.lt.s32.totalorder %s8, 1
        %s117 = scalar_select %p116, %s8, 1
        %s118 = smul.addr %s117, 4
        %s119 = smul.addr %s118, 4
        %s120 = scalar_lea.vmem %s1, %s119
      $region24: #{tpu_custom_call.1} parent=15 // pred_fallthru
        _
    $region16: #{tpu_custom_call.1} parent=5 // pred_fallthru
      _
    %p121 = scmp.le.s32.totalorder 1, %s8
    %p122 = scmp.lt.s32.totalorder %s8, 3
    %p123 = pnand %p121, %p122
    %p124 = pneg %p123
    // Predicated region
    $region25: #{tpu_custom_call.1} parent=5 // pred_check
      _
    $region26: #{tpu_custom_call.1} parent=5 // pred_check_branch
      %126 = sbr.rel (%p123) target = $region28
    $region27: #{tpu_custom_call.1} parent=5 // pred_region
      %s127 = ssub.s32 %s8, 1
      %p128 = scmp.lt.s32.totalorder %s13, 1
      %s129 = scalar_select %p128, %s13, 1
      %s130 = smul.addr %s129, 12
      %s131 = smul.addr %s130, 4
      %s132 = scalar_lea.vmem %s0, %s131
      %p133 = pneg %p34
      %p134 = pneg %p31
      %p135 = scmp.lt.s32.totalorder %s13, 1
      %s136 = scalar_select %p135, %s13, 1
      %s137 = smul.addr %s136, 4
      %s138 = smul.addr %s137, 4
      %s139 = scalar_lea.vmem %s1, %s138
      %p140 = pneg %p60
      %p141 = pneg %p57
      %p142 = pneg %p86
      %p143 = pneg %p83
      %p144 = scmp.lt.s32.totalorder %s13, 1
      %s145 = scalar_select %p144, %s13, 1
      %s146 = smul.addr %s145, 8
      %s147 = scalar_lea.vmem %s2, %s146
      %p148 = scmp.lt.s32.totalorder %s13, 1
      %s149 = scalar_select %p148, %s13, 1
      %s150 = smul.addr %s149, 12
      %s151 = smul.addr %s150, 4
      %s152 = scalar_lea.vmem %s0, %s151
      %p153 = scmp.lt.s32.totalorder %s13, 1
      %s154 = scalar_select %p153, %s13, 1
      %s155 = smul.addr %s154, 4
      %s156 = smul.addr %s155, 4
      %s157 = scalar_lea.vmem %s1, %s156
      %p158 = scmp.lt.s32.totalorder %s13, 1
      %s159 = scalar_select %p158, %s13, 1
      %s160 = smul.addr %s159, 8
      %s161 = scalar_lea.vmem %s2, %s160
      %v163 = vld [vmem:[%s152] sm:$0xf]
      %v164 = vld [vmem:[%s152 + $0x4] sm:$0xf]
      %v165 = vld [vmem:[%s152 + $0x8] sm:$0xf]
      %v166 = vld [vmem:[%s152 + $0xc] sm:$0xf]
      %v167 = vld [vmem:[%s152 + $0x10] sm:$0xf]
      %v168 = vld [vmem:[%s152 + $0x14] sm:$0xf]
      %v169 = vld [vmem:[%s152 + $0x18] sm:$0xf]
      %v170 = vld [vmem:[%s152 + $0x1c] sm:$0xf]
      %v171 = vld [vmem:[%s152 + $0x20] sm:$0xf]
      %v172 = vld [vmem:[%s152 + $0x24] sm:$0xf]
      %v173 = vld [vmem:[%s152 + $0x28] sm:$0xf]
      %v174 = vld [vmem:[%s152 + $0x2c] sm:$0xf]
      %v175 = vld [vmem:[%s157] sm:$0xf]
      %v176 = vld [vmem:[%s157 + $0x4] sm:$0xf]
      %v177 = vld [vmem:[%s157 + $0x8] sm:$0xf]
      %v178 = vld [vmem:[%s157 + $0xc] sm:$0xf]
      %v191 = vunpack.c.l.b16 %v163
      %v192 = vunpack.c.l.b16 %v164
      %v193 = vunpack.c.l.b16 %v165
      %v194 = vunpack.c.l.b16 %v166
      %v195 = vunpack.c.l.b16 %v167
      %v196 = vunpack.c.l.b16 %v168
      %v197 = vunpack.c.l.b16 %v169
      %v198 = vunpack.c.l.b16 %v170
      %v199 = vunpack.c.l.b16 %v171
      %v200 = vunpack.c.l.b16 %v172
      %v201 = vunpack.c.l.b16 %v173
      %v202 = vunpack.c.l.b16 %v174
      %v203 = vpack.c.b16 %v192, %v191
      %v204 = vpack.c.b16 %v194, %v193
      %v205 = vpack.c.b16 %v196, %v195
      %v206 = vpack.c.b16 %v198, %v197
      %v207 = vpack.c.b16 %v200, %v199
      %v208 = vpack.c.b16 %v202, %v201
      %v213 = vunpack.c.l.b16 %v175
      %v214 = vunpack.c.l.b16 %v176
      %v215 = vunpack.c.l.b16 %v177
      %v216 = vunpack.c.l.b16 %v178
      %v217 = vpack.c.b16 %v214, %v213
      %v218 = vpack.c.b16 %v216, %v215
      %vm221 = vcmask 261120
      %v223 = vsel %vm221, %v203, 0
      %v226 = vsel %vm221, %v204, 0
      %v229 = vsel %vm221, %v205, 0
      %v232 = vsel %vm221, %v206, 0
      %v235 = vsel %vm221, %v207, 0
      %v238 = vsel %vm221, %v208, 0
      %240 = vmatpush.bf16.msra.mxu0 0
      %241 = vmatpush.bf16.msra.mxu0 0
      %242 = vmatpush.bf16.msra.mxu0 0
      %243 = vmatpush.bf16.msra.mxu0 0
      %244 = vmatpush.bf16.msra.mxu0 0
      %245 = vmatpush.bf16.msra.mxu0 0
      %246 = vmatpush.bf16.msra.mxu0 %v218
      %247 = vmatpush.bf16.msra.mxu0 %v217
      %248 = vmatmul.bf16.gmra.mxu0 %v223
      %v249 = vpop.f32.mrf.mxu0
      %v250 = vadd.f32 0.0, %v249
      %v251 = vpop.f32.mrf.mxu0
      %v252 = vadd.f32 0.0, %v251
      %253 = vmatmul.bf16.gmra.mxu0 %v226
      %v254 = vpop.f32.mrf.mxu0
      %v255 = vadd.f32 0.0, %v254
      %v256 = vpop.f32.mrf.mxu0
      %v257 = vadd.f32 0.0, %v256
      %258 = vmatmul.bf16.gmra.mxu0 %v229
      %v259 = vpop.f32.mrf.mxu0
      %v260 = vadd.f32 0.0, %v259
      %v261 = vpop.f32.mrf.mxu0
      %v262 = vadd.f32 0.0, %v261
      %263 = vmatmul.bf16.gmra.mxu0 %v232
      %v264 = vpop.f32.mrf.mxu0
      %v265 = vadd.f32 0.0, %v264
      %v266 = vpop.f32.mrf.mxu0
      %v267 = vadd.f32 0.0, %v266
      %268 = vmatmul.bf16.gmra.mxu0 %v235
      %v269 = vpop.f32.mrf.mxu0
      %v270 = vadd.f32 0.0, %v269
      %v271 = vpop.f32.mrf.mxu0
      %v272 = vadd.f32 0.0, %v271
      %273 = vmatmul.bf16.gmra.mxu0 %v238
      %v274 = vpop.f32.mrf.mxu0
      %v275 = vadd.f32 0.0, %v274
      %v276 = vpop.f32.mrf.mxu0
      %v277 = vadd.f32 0.0, %v276
      %278 = vdwg.mxu0
      %v279 = vlaneseq
      %v280 = vand.u32 %v279, 127
      %vm281 = vcmp.lt.s32.totalorder %v280, 96
      %v282 = vsel %vm281, %v250, -inf
      %v283 = vsel %vm281, %v252, -inf
      %v284 = vsel %vm281, %v255, -inf
      %v285 = vsel %vm281, %v257, -inf
      %v286 = vsel %vm281, %v260, -inf
      %v287 = vsel %vm281, %v262, -inf
      %v288 = vsel %vm281, %v265, -inf
      %v289 = vsel %vm281, %v267, -inf
      %v290 = vsel %vm281, %v270, -inf
      %v291 = vsel %vm281, %v272, -inf
      %v292 = vsel %vm281, %v275, -inf
      %v293 = vsel %vm281, %v277, -inf
      %294 = vmax.xlane.f32.xlu0 %v282
      %v295 = vpop.xlane.xlu0 %294
      %296 = vmax.xlane.f32.xlu0 %v283
      %v297 = vpop.xlane.xlu0 %296
      %298 = vmax.xlane.f32.xlu0 %v284
      %v299 = vpop.xlane.xlu0 %298
      %300 = vmax.xlane.f32.xlu0 %v285
      %v301 = vpop.xlane.xlu0 %300
      %302 = vmax.xlane.f32.xlu0 %v286
      %v303 = vpop.xlane.xlu0 %302
      %304 = vmax.xlane.f32.xlu0 %v287
      %v305 = vpop.xlane.xlu0 %304
      %306 = vmax.xlane.f32.xlu0 %v288
      %v307 = vpop.xlane.xlu0 %306
      %308 = vmax.xlane.f32.xlu0 %v289
      %v309 = vpop.xlane.xlu0 %308
      %310 = vmax.xlane.f32.xlu0 %v290
      %v311 = vpop.xlane.xlu0 %310
      %312 = vmax.xlane.f32.xlu0 %v291
      %v313 = vpop.xlane.xlu0 %312
      %314 = vmax.xlane.f32.xlu0 %v292
      %v315 = vpop.xlane.xlu0 %314
      %316 = vmax.xlane.f32.xlu0 %v293
      %v317 = vpop.xlane.xlu0 %316
      %vm318 = vcmp.eq.f32.partialorder %v282, %v295
      %vm319 = vcmp.eq.f32.partialorder %v283, %v297
      %vm320 = vcmp.eq.f32.partialorder %v284, %v299
      %vm321 = vcmp.eq.f32.partialorder %v285, %v301
      %vm322 = vcmp.eq.f32.partialorder %v286, %v303
      %vm323 = vcmp.eq.f32.partialorder %v287, %v305
      %vm324 = vcmp.eq.f32.partialorder %v288, %v307
      %vm325 = vcmp.eq.f32.partialorder %v289, %v309
      %vm326 = vcmp.eq.f32.partialorder %v290, %v311
      %vm327 = vcmp.eq.f32.partialorder %v291, %v313
      %vm328 = vcmp.eq.f32.partialorder %v292, %v315
      %vm329 = vcmp.eq.f32.partialorder %v293, %v317
      %v330 = vsel %vm318, %v280, 96
      %v331 = vsel %vm319, %v280, 96
      %v332 = vsel %vm320, %v280, 96
      %v333 = vsel %vm321, %v280, 96
      %v334 = vsel %vm322, %v280, 96
      %v335 = vsel %vm323, %v280, 96
      %v336 = vsel %vm324, %v280, 96
      %v337 = vsel %vm325, %v280, 96
      %v338 = vsel %vm326, %v280, 96
      %v339 = vsel %vm327, %v280, 96
      %v340 = vsel %vm328, %v280, 96
      %v341 = vsel %vm329, %v280, 96
      %v342 = vand.u32 %v330, 65535
      %v343 = vshra.s32 %v330, 16
      %v344 = vcvt.s32.f32 %v342
      %v345 = vcvt.s32.f32 %v343
      %346 = vmin.xlane.f32.xlu0 %v345
      %v347 = vpop.xlane.xlu0 %346
      %vm348 = vcmp.eq.f32.partialorder %v345, %v347
      %v349 = vsel %vm348, %v344, inf
      %350 = vmin.xlane.f32.xlu0 %v349
      %v351 = vpop.xlane.xlu0 %350
      %v352 = vcvt.f32.s32 %v351
      %v353 = vcvt.f32.s32 %v347
      %v354 = vshll.u32 %v353, 16
      %v355 = vadd.s32 %v354, %v352
      %v356 = vand.u32 %v331, 65535
      %v357 = vshra.s32 %v331, 16
      %v358 = vcvt.s32.f32 %v356
      %v359 = vcvt.s32.f32 %v357
      %360 = vmin.xlane.f32.xlu0 %v359
      %v361 = vpop.xlane.xlu0 %360
      %vm362 = vcmp.eq.f32.partialorder %v359, %v361
      %v363 = vsel %vm362, %v358, inf
      %364 = vmin.xlane.f32.xlu0 %v363
      %v365 = vpop.xlane.xlu0 %364
      %v366 = vcvt.f32.s32 %v365
      %v367 = vcvt.f32.s32 %v361
      %v368 = vshll.u32 %v367, 16
      %v369 = vadd.s32 %v368, %v366
      %v370 = vand.u32 %v332, 65535
      %v371 = vshra.s32 %v332, 16
      %v372 = vcvt.s32.f32 %v370
      %v373 = vcvt.s32.f32 %v371
      %374 = vmin.xlane.f32.xlu0 %v373
      %v375 = vpop.xlane.xlu0 %374
      %vm376 = vcmp.eq.f32.partialorder %v373, %v375
      %v377 = vsel %vm376, %v372, inf
      %378 = vmin.xlane.f32.xlu0 %v377
      %v379 = vpop.xlane.xlu0 %378
      %v380 = vcvt.f32.s32 %v379
      %v381 = vcvt.f32.s32 %v375
      %v382 = vshll.u32 %v381, 16
      %v383 = vadd.s32 %v382, %v380
      %v384 = vand.u32 %v333, 65535
      %v385 = vshra.s32 %v333, 16
      %v386 = vcvt.s32.f32 %v384
      %v387 = vcvt.s32.f32 %v385
      %388 = vmin.xlane.f32.xlu0 %v387
      %v389 = vpop.xlane.xlu0 %388
      %vm390 = vcmp.eq.f32.partialorder %v387, %v389
      %v391 = vsel %vm390, %v386, inf
      %392 = vmin.xlane.f32.xlu0 %v391
      %v393 = vpop.xlane.xlu0 %392
      %v394 = vcvt.f32.s32 %v393
      %v395 = vcvt.f32.s32 %v389
      %v396 = vshll.u32 %v395, 16
      %v397 = vadd.s32 %v396, %v394
      %v398 = vand.u32 %v334, 65535
      %v399 = vshra.s32 %v334, 16
      %v400 = vcvt.s32.f32 %v398
      %v401 = vcvt.s32.f32 %v399
      %402 = vmin.xlane.f32.xlu0 %v401
      %v403 = vpop.xlane.xlu0 %402
      %vm404 = vcmp.eq.f32.partialorder %v401, %v403
      %v405 = vsel %vm404, %v400, inf
      %406 = vmin.xlane.f32.xlu0 %v405
      %v407 = vpop.xlane.xlu0 %406
      %v408 = vcvt.f32.s32 %v407
      %v409 = vcvt.f32.s32 %v403
      %v410 = vshll.u32 %v409, 16
      %v411 = vadd.s32 %v410, %v408
      %v412 = vand.u32 %v335, 65535
      %v413 = vshra.s32 %v335, 16
      %v414 = vcvt.s32.f32 %v412
      %v415 = vcvt.s32.f32 %v413
      %416 = vmin.xlane.f32.xlu0 %v415
      %v417 = vpop.xlane.xlu0 %416
      %vm418 = vcmp.eq.f32.partialorder %v415, %v417
      %v419 = vsel %vm418, %v414, inf
      %420 = vmin.xlane.f32.xlu0 %v419
      %v421 = vpop.xlane.xlu0 %420
      %v422 = vcvt.f32.s32 %v421
      %v423 = vcvt.f32.s32 %v417
      %v424 = vshll.u32 %v423, 16
      %v425 = vadd.s32 %v424, %v422
      %v426 = vand.u32 %v336, 65535
      %v427 = vshra.s32 %v336, 16
      %v428 = vcvt.s32.f32 %v426
      %v429 = vcvt.s32.f32 %v427
      %430 = vmin.xlane.f32.xlu0 %v429
      %v431 = vpop.xlane.xlu0 %430
      %vm432 = vcmp.eq.f32.partialorder %v429, %v431
      %v433 = vsel %vm432, %v428, inf
      %434 = vmin.xlane.f32.xlu0 %v433
      %v435 = vpop.xlane.xlu0 %434
      %v436 = vcvt.f32.s32 %v435
      %v437 = vcvt.f32.s32 %v431
      %v438 = vshll.u32 %v437, 16
      %v439 = vadd.s32 %v438, %v436
      %v440 = vand.u32 %v337, 65535
      %v441 = vshra.s32 %v337, 16
      %v442 = vcvt.s32.f32 %v440
      %v443 = vcvt.s32.f32 %v441
      %444 = vmin.xlane.f32.xlu0 %v443
      %v445 = vpop.xlane.xlu0 %444
      %vm446 = vcmp.eq.f32.partialorder %v443, %v445
      %v447 = vsel %vm446, %v442, inf
      %448 = vmin.xlane.f32.xlu0 %v447
      %v449 = vpop.xlane.xlu0 %448
      %v450 = vcvt.f32.s32 %v449
      %v451 = vcvt.f32.s32 %v445
      %v452 = vshll.u32 %v451, 16
      %v453 = vadd.s32 %v452, %v450
      %v454 = vand.u32 %v338, 65535
      %v455 = vshra.s32 %v338, 16
      %v456 = vcvt.s32.f32 %v454
      %v457 = vcvt.s32.f32 %v455
      %458 = vmin.xlane.f32.xlu0 %v457
      %v459 = vpop.xlane.xlu0 %458
      %vm460 = vcmp.eq.f32.partialorder %v457, %v459
      %v461 = vsel %vm460, %v456, inf
      %462 = vmin.xlane.f32.xlu0 %v461
      %v463 = vpop.xlane.xlu0 %462
      %v464 = vcvt.f32.s32 %v463
      %v465 = vcvt.f32.s32 %v459
      %v466 = vshll.u32 %v465, 16
      %v467 = vadd.s32 %v466, %v464
      %v468 = vand.u32 %v339, 65535
      %v469 = vshra.s32 %v339, 16
      %v470 = vcvt.s32.f32 %v468
      %v471 = vcvt.s32.f32 %v469
      %472 = vmin.xlane.f32.xlu0 %v471
      %v473 = vpop.xlane.xlu0 %472
      %vm474 = vcmp.eq.f32.partialorder %v471, %v473
      %v475 = vsel %vm474, %v470, inf
      %476 = vmin.xlane.f32.xlu0 %v475
      %v477 = vpop.xlane.xlu0 %476
      %v478 = vcvt.f32.s32 %v477
      %v479 = vcvt.f32.s32 %v473
      %v480 = vshll.u32 %v479, 16
      %v481 = vadd.s32 %v480, %v478
      %v482 = vand.u32 %v340, 65535
      %v483 = vshra.s32 %v340, 16
      %v484 = vcvt.s32.f32 %v482
      %v485 = vcvt.s32.f32 %v483
      %486 = vmin.xlane.f32.xlu0 %v485
      %v487 = vpop.xlane.xlu0 %486
      %vm488 = vcmp.eq.f32.partialorder %v485, %v487
      %v489 = vsel %vm488, %v484, inf
      %490 = vmin.xlane.f32.xlu0 %v489
      %v491 = vpop.xlane.xlu0 %490
      %v492 = vcvt.f32.s32 %v491
      %v493 = vcvt.f32.s32 %v487
      %v494 = vshll.u32 %v493, 16
      %v495 = vadd.s32 %v494, %v492
      %v496 = vand.u32 %v341, 65535
      %v497 = vshra.s32 %v341, 16
      %v498 = vcvt.s32.f32 %v496
      %v499 = vcvt.s32.f32 %v497
      %500 = vmin.xlane.f32.xlu0 %v499
      %v501 = vpop.xlane.xlu0 %500
      %vm502 = vcmp.eq.f32.partialorder %v499, %v501
      %v503 = vsel %vm502, %v498, inf
      %504 = vmin.xlane.f32.xlu0 %v503
      %v505 = vpop.xlane.xlu0 %504
      %v506 = vcvt.f32.s32 %v505
      %v507 = vcvt.f32.s32 %v501
      %v508 = vshll.u32 %v507, 16
      %v509 = vadd.s32 %v508, %v506
      %v510 = vsel %vm221, %v250, -inf
      %511 = vmax.xlane.f32.xlu0 %v510
      %v512 = vpop.xlane.xlu0 %511
      %v513 = vsel %vm221, %v252, -inf
      %514 = vmax.xlane.f32.xlu0 %v513
      %v515 = vpop.xlane.xlu0 %514
      %v516 = vsel %vm221, %v255, -inf
      %517 = vmax.xlane.f32.xlu0 %v516
      %v518 = vpop.xlane.xlu0 %517
      %v519 = vsel %vm221, %v257, -inf
      %520 = vmax.xlane.f32.xlu0 %v519
      %v521 = vpop.xlane.xlu0 %520
      %v522 = vsel %vm221, %v260, -inf
      %523 = vmax.xlane.f32.xlu0 %v522
      %v524 = vpop.xlane.xlu0 %523
      %v525 = vsel %vm221, %v262, -inf
      %526 = vmax.xlane.f32.xlu0 %v525
      %v527 = vpop.xlane.xlu0 %526
      %v528 = vsel %vm221, %v265, -inf
      %529 = vmax.xlane.f32.xlu0 %v528
      %v530 = vpop.xlane.xlu0 %529
      %v531 = vsel %vm221, %v267, -inf
      %532 = vmax.xlane.f32.xlu0 %v531
      %v533 = vpop.xlane.xlu0 %532
      %v534 = vsel %vm221, %v270, -inf
      %535 = vmax.xlane.f32.xlu0 %v534
      %v536 = vpop.xlane.xlu0 %535
      %v537 = vsel %vm221, %v272, -inf
      %538 = vmax.xlane.f32.xlu0 %v537
      %v539 = vpop.xlane.xlu0 %538
      %v540 = vsel %vm221, %v275, -inf
      %541 = vmax.xlane.f32.xlu0 %v540
      %v542 = vpop.xlane.xlu0 %541
      %v543 = vsel %vm221, %v277, -inf
      %544 = vmax.xlane.f32.xlu0 %v543
      %v545 = vpop.xlane.xlu0 %544
      %vm546 = vcmp.eq.s32.totalorder %v280, 0
      %v547 = vsel %vm546, %v512, 0.0
      %v548 = vsel %vm546, %v515, 0.0
      %v549 = vsel %vm546, %v518, 0.0
      %v550 = vsel %vm546, %v521, 0.0
      %v551 = vsel %vm546, %v524, 0.0
      %v552 = vsel %vm546, %v527, 0.0
      %v553 = vsel %vm546, %v530, 0.0
      %v554 = vsel %vm546, %v533, 0.0
      %v555 = vsel %vm546, %v536, 0.0
      %v556 = vsel %vm546, %v539, 0.0
      %v557 = vsel %vm546, %v542, 0.0
      %v558 = vsel %vm546, %v545, 0.0
      %vm559 = vcmask 523520
      %v560 = vsel %vm559, %v250, -inf
      %561 = vmax.xlane.f32.xlu0 %v560
      %v562 = vpop.xlane.xlu0 %561
      %v563 = vsel %vm559, %v252, -inf
      %564 = vmax.xlane.f32.xlu0 %v563
      %v565 = vpop.xlane.xlu0 %564
      %v566 = vsel %vm559, %v255, -inf
      %567 = vmax.xlane.f32.xlu0 %v566
      %v568 = vpop.xlane.xlu0 %567
      %v569 = vsel %vm559, %v257, -inf
      %570 = vmax.xlane.f32.xlu0 %v569
      %v571 = vpop.xlane.xlu0 %570
      %v572 = vsel %vm559, %v260, -inf
      %573 = vmax.xlane.f32.xlu0 %v572
      %v574 = vpop.xlane.xlu0 %573
      %v575 = vsel %vm559, %v262, -inf
      %576 = vmax.xlane.f32.xlu0 %v575
      %v577 = vpop.xlane.xlu0 %576
      %v578 = vsel %vm559, %v265, -inf
      %579 = vmax.xlane.f32.xlu0 %v578
      %v580 = vpop.xlane.xlu0 %579
      %v581 = vsel %vm559, %v267, -inf
      %582 = vmax.xlane.f32.xlu0 %v581
      %v583 = vpop.xlane.xlu0 %582
      %v584 = vsel %vm559, %v270, -inf
      %585 = vmax.xlane.f32.xlu0 %v584
      %v586 = vpop.xlane.xlu0 %585
      %v587 = vsel %vm559, %v272, -inf
      %588 = vmax.xlane.f32.xlu0 %v587
      %v589 = vpop.xlane.xlu0 %588
      %v590 = vsel %vm559, %v275, -inf
      %591 = vmax.xlane.f32.xlu0 %v590
      %v592 = vpop.xlane.xlu0 %591
      %v593 = vsel %vm559, %v277, -inf
      %594 = vmax.xlane.f32.xlu0 %v593
      %v595 = vpop.xlane.xlu0 %594
      %vm596 = vcmp.eq.s32.totalorder %v280, 1
      %v597 = vsel %vm596, %v562, %v547
      %v598 = vsel %vm596, %v565, %v548
      %v599 = vsel %vm596, %v568, %v549
      %v600 = vsel %vm596, %v571, %v550
      %v601 = vsel %vm596, %v574, %v551
      %v602 = vsel %vm596, %v577, %v552
      %v603 = vsel %vm596, %v580, %v553
      %v604 = vsel %vm596, %v583, %v554
      %v605 = vsel %vm596, %v586, %v555
      %v606 = vsel %vm596, %v589, %v556
      %v607 = vsel %vm596, %v592, %v557
      %v608 = vsel %vm596, %v595, %v558
      %v609 = vmin.f32 %v512, %v562
      %v610 = vmin.f32 %v515, %v565
      %v611 = vmin.f32 %v518, %v568
      %v612 = vmin.f32 %v521, %v571
      %v613 = vmin.f32 %v524, %v574
      %v614 = vmin.f32 %v527, %v577
      %v615 = vmin.f32 %v530, %v580
      %v616 = vmin.f32 %v533, %v583
      %v617 = vmin.f32 %v536, %v586
      %v618 = vmin.f32 %v539, %v589
      %v619 = vmin.f32 %v542, %v592
      %v620 = vmin.f32 %v545, %v595
      %v621 = vmax.f32 %v512, %v562
      %v622 = vmax.f32 %v515, %v565
      %v623 = vmax.f32 %v518, %v568
      %v624 = vmax.f32 %v521, %v571
      %v625 = vmax.f32 %v524, %v574
      %v626 = vmax.f32 %v527, %v577
      %v627 = vmax.f32 %v530, %v580
      %v628 = vmax.f32 %v533, %v583
      %v629 = vmax.f32 %v536, %v586
      %v630 = vmax.f32 %v539, %v589
      %v631 = vmax.f32 %v542, %v592
      %v632 = vmax.f32 %v545, %v595
      %vm633 = vcmask 785920
      %v634 = vsel %vm633, %v250, -inf
      %635 = vmax.xlane.f32.xlu0 %v634
      %v636 = vpop.xlane.xlu0 %635
      %v637 = vsel %vm633, %v252, -inf
      %638 = vmax.xlane.f32.xlu0 %v637
      %v639 = vpop.xlane.xlu0 %638
      %v640 = vsel %vm633, %v255, -inf
      %641 = vmax.xlane.f32.xlu0 %v640
      %v642 = vpop.xlane.xlu0 %641
      %v643 = vsel %vm633, %v257, -inf
      %644 = vmax.xlane.f32.xlu0 %v643
      %v645 = vpop.xlane.xlu0 %644
      %v646 = vsel %vm633, %v260, -inf
      %647 = vmax.xlane.f32.xlu0 %v646
      %v648 = vpop.xlane.xlu0 %647
      %v649 = vsel %vm633, %v262, -inf
      %650 = vmax.xlane.f32.xlu0 %v649
      %v651 = vpop.xlane.xlu0 %650
      %v652 = vsel %vm633, %v265, -inf
      %653 = vmax.xlane.f32.xlu0 %v652
      %v654 = vpop.xlane.xlu0 %653
      %v655 = vsel %vm633, %v267, -inf
      %656 = vmax.xlane.f32.xlu0 %v655
      %v657 = vpop.xlane.xlu0 %656
      %v658 = vsel %vm633, %v270, -inf
      %659 = vmax.xlane.f32.xlu0 %v658
      %v660 = vpop.xlane.xlu0 %659
      %v661 = vsel %vm633, %v272, -inf
      %662 = vmax.xlane.f32.xlu0 %v661
      %v663 = vpop.xlane.xlu0 %662
      %v664 = vsel %vm633, %v275, -inf
      %665 = vmax.xlane.f32.xlu0 %v664
      %v666 = vpop.xlane.xlu0 %665
      %v667 = vsel %vm633, %v277, -inf
      %668 = vmax.xlane.f32.xlu0 %v667
      %v669 = vpop.xlane.xlu0 %668
      %vm670 = vcmp.eq.s32.totalorder %v280, 2
      %v671 = vsel %vm670, %v636, %v597
      %v672 = vsel %vm670, %v639, %v598
      %v673 = vsel %vm670, %v642, %v599
      %v674 = vsel %vm670, %v645, %v600
      %v675 = vsel %vm670, %v648, %v601
      %v676 = vsel %vm670, %v651, %v602
      %v677 = vsel %vm670, %v654, %v603
      %v678 = vsel %vm670, %v657, %v604
      %v679 = vsel %vm670, %v660, %v605
      %v680 = vsel %vm670, %v663, %v606
      %v681 = vsel %vm670, %v666, %v607
      %v682 = vsel %vm670, %v669, %v608
      %v683 = vmin.f32 %v621, %v636
      %v684 = vmin.f32 %v622, %v639
      %v685 = vmin.f32 %v623, %v642
      %v686 = vmin.f32 %v624, %v645
      %v687 = vmin.f32 %v625, %v648
      %v688 = vmin.f32 %v626, %v651
      %v689 = vmin.f32 %v627, %v654
      %v690 = vmin.f32 %v628, %v657
      %v691 = vmin.f32 %v629, %v660
      %v692 = vmin.f32 %v630, %v663
      %v693 = vmin.f32 %v631, %v666
      %v694 = vmin.f32 %v632, %v669
      %v695 = vmax.f32 %v609, %v683
      %v696 = vmax.f32 %v610, %v684
      %v697 = vmax.f32 %v611, %v685
      %v698 = vmax.f32 %v612, %v686
      %v699 = vmax.f32 %v613, %v687
      %v700 = vmax.f32 %v614, %v688
      %v701 = vmax.f32 %v615, %v689
      %v702 = vmax.f32 %v616, %v690
      %v703 = vmax.f32 %v617, %v691
      %v704 = vmax.f32 %v618, %v692
      %v705 = vmax.f32 %v619, %v693
      %v706 = vmax.f32 %v620, %v694
      %v707 = vmax.f32 %v621, %v636
      %v708 = vmax.f32 %v622, %v639
      %v709 = vmax.f32 %v623, %v642
      %v710 = vmax.f32 %v624, %v645
      %v711 = vmax.f32 %v625, %v648
      %v712 = vmax.f32 %v626, %v651
      %v713 = vmax.f32 %v627, %v654
      %v714 = vmax.f32 %v628, %v657
      %v715 = vmax.f32 %v629, %v660
      %v716 = vmax.f32 %v630, %v663
      %v717 = vmax.f32 %v631, %v666
      %v718 = vmax.f32 %v632, %v669
      %v719 = vsub.f32 %v707, %v695
      %v720 = vsub.f32 %v708, %v696
      %v721 = vsub.f32 %v709, %v697
      %v722 = vsub.f32 %v710, %v698
      %v723 = vsub.f32 %v711, %v699
      %v724 = vsub.f32 %v712, %v700
      %v725 = vsub.f32 %v713, %v701
      %v726 = vsub.f32 %v714, %v702
      %v727 = vsub.f32 %v715, %v703
      %v728 = vsub.f32 %v716, %v704
      %v729 = vsub.f32 %v717, %v705
      %v730 = vsub.f32 %v718, %v706
      %vm731 = vcmp.eq.s32.totalorder %v355, %v280
      %vm732 = vcmp.eq.s32.totalorder %v369, %v280
      %vm733 = vcmp.eq.s32.totalorder %v383, %v280
      %vm734 = vcmp.eq.s32.totalorder %v397, %v280
      %vm735 = vcmp.eq.s32.totalorder %v411, %v280
      %vm736 = vcmp.eq.s32.totalorder %v425, %v280
      %vm737 = vcmp.eq.s32.totalorder %v439, %v280
      %vm738 = vcmp.eq.s32.totalorder %v453, %v280
      %vm739 = vcmp.eq.s32.totalorder %v467, %v280
      %vm740 = vcmp.eq.s32.totalorder %v481, %v280
      %vm741 = vcmp.eq.s32.totalorder %v495, %v280
      %vm742 = vcmp.eq.s32.totalorder %v509, %v280
      %v743 = vsel %vm731, %v719, 0.0
      %v744 = vsel %vm732, %v720, 0.0
      %v745 = vsel %vm733, %v721, 0.0
      %v746 = vsel %vm734, %v722, 0.0
      %v747 = vsel %vm735, %v723, 0.0
      %v748 = vsel %vm736, %v724, 0.0
      %v749 = vsel %vm737, %v725, 0.0
      %v750 = vsel %vm738, %v726, 0.0
      %v751 = vsel %vm739, %v727, 0.0
      %v752 = vsel %vm740, %v728, 0.0
      %v753 = vsel %vm741, %v729, 0.0
      %v754 = vsel %vm742, %v730, 0.0
      %v755 = vlaneseq
      %v756 = vshrl.u32 %v755, 7
      %v757 = vadd.s32 %v756, 8
      %v758 = vmax.f32 %v743, %v744
      %v759 = vrot.slane %v758, 4
      %v760 = vmax.f32 %v758, %v759
      %v761 = vrot.slane %v760, 2
      %v762 = vmax.f32 %v760, %v761
      %v763 = vrot.slane %v762, 1
      %v764 = vmax.f32 %v762, %v763
      %vm765 = vcmp.eq.f32.partialorder %v743, %v764
      %vm766 = vcmp.eq.f32.partialorder %v744, %v764
      %v767 = vsel %vm765, %v756, 16
      %v768 = vsel %vm766, %v757, 16
      %vm769 = vcmp.lt.s32.totalorder %v767, %v768
      %v770 = vsel %vm769, %v767, %v768
      %v771 = vrot.slane %v770, 4
      %vm772 = vcmp.lt.s32.totalorder %v770, %v771
      %v773 = vsel %vm772, %v770, %v771
      %v774 = vrot.slane %v773, 2
      %vm775 = vcmp.lt.s32.totalorder %v773, %v774
      %v776 = vsel %vm775, %v773, %v774
      %v777 = vrot.slane %v776, 1
      %vm778 = vcmp.lt.s32.totalorder %v776, %v777
      %v779 = vsel %vm778, %v776, %v777
      %v780 = vsel %vm731, %v779, 0
      %v781 = vsel %vm732, %v779, 0
      %v782 = vand.u32 %v780, 65535
      %v783 = vshrl.u32 %v780, 16
      %v784 = vcvt.s32.f32 %v782
      %v785 = vcvt.s32.f32 %v783
      %786 = vadd.xlane.f32.xlu0 %v784
      %v787 = vpop.xlane.xlu0 %786
      %788 = vadd.xlane.f32.xlu0 %v785
      %v789 = vpop.xlane.xlu0 %788
      %v790 = vcvt.f32.s32 %v787
      %v791 = vcvt.f32.s32 %v789
      %v792 = vshll.u32 %v791, 16
      %v793 = vadd.s32 %v792, %v790
      %v794 = vand.u32 %v781, 65535
      %v795 = vshrl.u32 %v781, 16
      %v796 = vcvt.s32.f32 %v794
      %v797 = vcvt.s32.f32 %v795
      %798 = vadd.xlane.f32.xlu0 %v796
      %v799 = vpop.xlane.xlu0 %798
      %800 = vadd.xlane.f32.xlu0 %v797
      %v801 = vpop.xlane.xlu0 %800
      %v802 = vcvt.f32.s32 %v799
      %v803 = vcvt.f32.s32 %v801
      %v804 = vshll.u32 %v803, 16
      %v805 = vadd.s32 %v804, %v802
      %vm806 = vcmp.eq.s32.totalorder %v793, %v756
      %vm807 = vcmp.eq.s32.totalorder %v805, %v757
      %v808 = vsel %vm806, 1, 0
      %v809 = vsel %vm807, 1, 0
      %v810 = vcvt.s32.f32 %v808
      %v811 = vcvt.s32.f32 %v809
      %v812 = vmul.f32 %v671, %v810
      %v813 = vmul.f32 %v672, %v811
      %vm814 = vcmask 23552
      %v815 = vsel %vm814, %v812, 0.0
      %v816 = vsel %vm814, %v813, 0.0
      %v817 = vadd.f32 %v815, %v816
      %v818 = vrot.slane %v817, 4
      %v819 = vadd.f32 %v817, %v818
      %v820 = vrot.slane %v819, 2
      %v821 = vadd.f32 %v819, %v820
      %v822 = vrot.slane %v821, 1
      %v823 = vadd.f32 %v821, %v822
      %vm824 = vcmp.eq.s32.totalorder %v756, 0
      %v825 = vsel %vm824, %v823, 0.0
      %v826 = vmax.f32 %v745, %v746
      %v827 = vrot.slane %v826, 4
      %v828 = vmax.f32 %v826, %v827
      %v829 = vrot.slane %v828, 2
      %v830 = vmax.f32 %v828, %v829
      %v831 = vrot.slane %v830, 1
      %v832 = vmax.f32 %v830, %v831
      %vm833 = vcmp.eq.f32.partialorder %v745, %v832
      %vm834 = vcmp.eq.f32.partialorder %v746, %v832
      %v835 = vsel %vm833, %v756, 16
      %v836 = vsel %vm834, %v757, 16
      %vm837 = vcmp.lt.s32.totalorder %v835, %v836
      %v838 = vsel %vm837, %v835, %v836
      %v839 = vrot.slane %v838, 4
      %vm840 = vcmp.lt.s32.totalorder %v838, %v839
      %v841 = vsel %vm840, %v838, %v839
      %v842 = vrot.slane %v841, 2
      %vm843 = vcmp.lt.s32.totalorder %v841, %v842
      %v844 = vsel %vm843, %v841, %v842
      %v845 = vrot.slane %v844, 1
      %vm846 = vcmp.lt.s32.totalorder %v844, %v845
      %v847 = vsel %vm846, %v844, %v845
      %v848 = vsel %vm733, %v847, 0
      %v849 = vsel %vm734, %v847, 0
      %v850 = vand.u32 %v848, 65535
      %v851 = vshrl.u32 %v848, 16
      %v852 = vcvt.s32.f32 %v850
      %v853 = vcvt.s32.f32 %v851
      %854 = vadd.xlane.f32.xlu0 %v852
      %v855 = vpop.xlane.xlu0 %854
      %856 = vadd.xlane.f32.xlu0 %v853
      %v857 = vpop.xlane.xlu0 %856
      %v858 = vcvt.f32.s32 %v855
      %v859 = vcvt.f32.s32 %v857
      %v860 = vshll.u32 %v859, 16
      %v861 = vadd.s32 %v860, %v858
      %v862 = vand.u32 %v849, 65535
      %v863 = vshrl.u32 %v849, 16
      %v864 = vcvt.s32.f32 %v862
      %v865 = vcvt.s32.f32 %v863
      %866 = vadd.xlane.f32.xlu0 %v864
      %v867 = vpop.xlane.xlu0 %866
      %868 = vadd.xlane.f32.xlu0 %v865
      %v869 = vpop.xlane.xlu0 %868
      %v870 = vcvt.f32.s32 %v867
      %v871 = vcvt.f32.s32 %v869
      %v872 = vshll.u32 %v871, 16
      %v873 = vadd.s32 %v872, %v870
      %vm874 = vcmp.eq.s32.totalorder %v861, %v756
      %vm875 = vcmp.eq.s32.totalorder %v873, %v757
      %v876 = vsel %vm874, 1, 0
      %v877 = vsel %vm875, 1, 0
      %v878 = vcvt.s32.f32 %v876
      %v879 = vcvt.s32.f32 %v877
      %v880 = vmul.f32 %v673, %v878
      %v881 = vmul.f32 %v674, %v879
      %v882 = vsel %vm814, %v880, 0.0
      %v883 = vsel %vm814, %v881, 0.0
      %v884 = vadd.f32 %v882, %v883
      %v885 = vrot.slane %v884, 4
      %v886 = vadd.f32 %v884, %v885
      %v887 = vrot.slane %v886, 2
      %v888 = vadd.f32 %v886, %v887
      %v889 = vrot.slane %v888, 1
      %v890 = vadd.f32 %v888, %v889
      %vm891 = vcmp.eq.s32.totalorder %v756, 1
      %v892 = vsel %vm891, %v890, %v825
      %v893 = vmax.f32 %v747, %v748
      %v894 = vrot.slane %v893, 4
      %v895 = vmax.f32 %v893, %v894
      %v896 = vrot.slane %v895, 2
      %v897 = vmax.f32 %v895, %v896
      %v898 = vrot.slane %v897, 1
      %v899 = vmax.f32 %v897, %v898
      %vm900 = vcmp.eq.f32.partialorder %v747, %v899
      %vm901 = vcmp.eq.f32.partialorder %v748, %v899
      %v902 = vsel %vm900, %v756, 16
      %v903 = vsel %vm901, %v757, 16
      %vm904 = vcmp.lt.s32.totalorder %v902, %v903
      %v905 = vsel %vm904, %v902, %v903
      %v906 = vrot.slane %v905, 4
      %vm907 = vcmp.lt.s32.totalorder %v905, %v906
      %v908 = vsel %vm907, %v905, %v906
      %v909 = vrot.slane %v908, 2
      %vm910 = vcmp.lt.s32.totalorder %v908, %v909
      %v911 = vsel %vm910, %v908, %v909
      %v912 = vrot.slane %v911, 1
      %vm913 = vcmp.lt.s32.totalorder %v911, %v912
      %v914 = vsel %vm913, %v911, %v912
      %v915 = vsel %vm735, %v914, 0
      %v916 = vsel %vm736, %v914, 0
      %v917 = vand.u32 %v915, 65535
      %v918 = vshrl.u32 %v915, 16
      %v919 = vcvt.s32.f32 %v917
      %v920 = vcvt.s32.f32 %v918
      %921 = vadd.xlane.f32.xlu0 %v919
      %v922 = vpop.xlane.xlu0 %921
      %923 = vadd.xlane.f32.xlu0 %v920
      %v924 = vpop.xlane.xlu0 %923
      %v925 = vcvt.f32.s32 %v922
      %v926 = vcvt.f32.s32 %v924
      %v927 = vshll.u32 %v926, 16
      %v928 = vadd.s32 %v927, %v925
      %v929 = vand.u32 %v916, 65535
      %v930 = vshrl.u32 %v916, 16
      %v931 = vcvt.s32.f32 %v929
      %v932 = vcvt.s32.f32 %v930
      %933 = vadd.xlane.f32.xlu0 %v931
      %v934 = vpop.xlane.xlu0 %933
      %935 = vadd.xlane.f32.xlu0 %v932
      %v936 = vpop.xlane.xlu0 %935
      %v937 = vcvt.f32.s32 %v934
      %v938 = vcvt.f32.s32 %v936
      %v939 = vshll.u32 %v938, 16
      %v940 = vadd.s32 %v939, %v937
      %vm941 = vcmp.eq.s32.totalorder %v928, %v756
      %vm942 = vcmp.eq.s32.totalorder %v940, %v757
      %v943 = vsel %vm941, 1, 0
      %v944 = vsel %vm942, 1, 0
      %v945 = vcvt.s32.f32 %v943
      %v946 = vcvt.s32.f32 %v944
      %v947 = vmul.f32 %v675, %v945
      %v948 = vmul.f32 %v676, %v946
      %v949 = vsel %vm814, %v947, 0.0
      %v950 = vsel %vm814, %v948, 0.0
      %v951 = vadd.f32 %v949, %v950
      %v952 = vrot.slane %v951, 4
      %v953 = vadd.f32 %v951, %v952
      %v954 = vrot.slane %v953, 2
      %v955 = vadd.f32 %v953, %v954
      %v956 = vrot.slane %v955, 1
      %v957 = vadd.f32 %v955, %v956
      %vm958 = vcmp.eq.s32.totalorder %v756, 2
      %v959 = vsel %vm958, %v957, %v892
      %v960 = vmax.f32 %v749, %v750
      %v961 = vrot.slane %v960, 4
      %v962 = vmax.f32 %v960, %v961
      %v963 = vrot.slane %v962, 2
      %v964 = vmax.f32 %v962, %v963
      %v965 = vrot.slane %v964, 1
      %v966 = vmax.f32 %v964, %v965
      %vm967 = vcmp.eq.f32.partialorder %v749, %v966
      %vm968 = vcmp.eq.f32.partialorder %v750, %v966
      %v969 = vsel %vm967, %v756, 16
      %v970 = vsel %vm968, %v757, 16
      %vm971 = vcmp.lt.s32.totalorder %v969, %v970
      %v972 = vsel %vm971, %v969, %v970
      %v973 = vrot.slane %v972, 4
      %vm974 = vcmp.lt.s32.totalorder %v972, %v973
      %v975 = vsel %vm974, %v972, %v973
      %v976 = vrot.slane %v975, 2
      %vm977 = vcmp.lt.s32.totalorder %v975, %v976
      %v978 = vsel %vm977, %v975, %v976
      %v979 = vrot.slane %v978, 1
      %vm980 = vcmp.lt.s32.totalorder %v978, %v979
      %v981 = vsel %vm980, %v978, %v979
      %v982 = vsel %vm737, %v981, 0
      %v983 = vsel %vm738, %v981, 0
      %v984 = vand.u32 %v982, 65535
      %v985 = vshrl.u32 %v982, 16
      %v986 = vcvt.s32.f32 %v984
      %v987 = vcvt.s32.f32 %v985
      %988 = vadd.xlane.f32.xlu0 %v986
      %v989 = vpop.xlane.xlu0 %988
      %990 = vadd.xlane.f32.xlu0 %v987
      %v991 = vpop.xlane.xlu0 %990
      %v992 = vcvt.f32.s32 %v989
      %v993 = vcvt.f32.s32 %v991
      %v994 = vshll.u32 %v993, 16
      %v995 = vadd.s32 %v994, %v992
      %v996 = vand.u32 %v983, 65535
      %v997 = vshrl.u32 %v983, 16
      %v998 = vcvt.s32.f32 %v996
      %v999 = vcvt.s32.f32 %v997
      %1000 = vadd.xlane.f32.xlu0 %v998
      %v1001 = vpop.xlane.xlu0 %1000
      %1002 = vadd.xlane.f32.xlu0 %v999
      %v1003 = vpop.xlane.xlu0 %1002
      %v1004 = vcvt.f32.s32 %v1001
      %v1005 = vcvt.f32.s32 %v1003
      %v1006 = vshll.u32 %v1005, 16
      %v1007 = vadd.s32 %v1006, %v1004
      %vm1008 = vcmp.eq.s32.totalorder %v995, %v756
      %vm1009 = vcmp.eq.s32.totalorder %v1007, %v757
      %v1010 = vsel %vm1008, 1, 0
      %v1011 = vsel %vm1009, 1, 0
      %v1012 = vcvt.s32.f32 %v1010
      %v1013 = vcvt.s32.f32 %v1011
      %v1014 = vmul.f32 %v677, %v1012
      %v1015 = vmul.f32 %v678, %v1013
      %v1016 = vsel %vm814, %v1014, 0.0
      %v1017 = vsel %vm814, %v1015, 0.0
      %v1018 = vadd.f32 %v1016, %v1017
      %v1019 = vrot.slane %v1018, 4
      %v1020 = vadd.f32 %v1018, %v1019
      %v1021 = vrot.slane %v1020, 2
      %v1022 = vadd.f32 %v1020, %v1021
      %v1023 = vrot.slane %v1022, 1
      %v1024 = vadd.f32 %v1022, %v1023
      %vm1025 = vcmp.eq.s32.totalorder %v756, 3
      %v1026 = vsel %vm1025, %v1024, %v959
      %v1027 = vmax.f32 %v751, %v752
      %v1028 = vrot.slane %v1027, 4
      %v1029 = vmax.f32 %v1027, %v1028
      %v1030 = vrot.slane %v1029, 2
      %v1031 = vmax.f32 %v1029, %v1030
      %v1032 = vrot.slane %v1031, 1
      %v1033 = vmax.f32 %v1031, %v1032
      %vm1034 = vcmp.eq.f32.partialorder %v751, %v1033
      %vm1035 = vcmp.eq.f32.partialorder %v752, %v1033
      %v1036 = vsel %vm1034, %v756, 16
      %v1037 = vsel %vm1035, %v757, 16
      %vm1038 = vcmp.lt.s32.totalorder %v1036, %v1037
      %v1039 = vsel %vm1038, %v1036, %v1037
      %v1040 = vrot.slane %v1039, 4
      %vm1041 = vcmp.lt.s32.totalorder %v1039, %v1040
      %v1042 = vsel %vm1041, %v1039, %v1040
      %v1043 = vrot.slane %v1042, 2
      %vm1044 = vcmp.lt.s32.totalorder %v1042, %v1043
      %v1045 = vsel %vm1044, %v1042, %v1043
      %v1046 = vrot.slane %v1045, 1
      %vm1047 = vcmp.lt.s32.totalorder %v1045, %v1046
      %v1048 = vsel %vm1047, %v1045, %v1046
      %v1049 = vsel %vm739, %v1048, 0
      %v1050 = vsel %vm740, %v1048, 0
      %v1051 = vand.u32 %v1049, 65535
      %v1052 = vshrl.u32 %v1049, 16
      %v1053 = vcvt.s32.f32 %v1051
      %v1054 = vcvt.s32.f32 %v1052
      %1055 = vadd.xlane.f32.xlu0 %v1053
      %v1056 = vpop.xlane.xlu0 %1055
      %1057 = vadd.xlane.f32.xlu0 %v1054
      %v1058 = vpop.xlane.xlu0 %1057
      %v1059 = vcvt.f32.s32 %v1056
      %v1060 = vcvt.f32.s32 %v1058
      %v1061 = vshll.u32 %v1060, 16
      %v1062 = vadd.s32 %v1061, %v1059
      %v1063 = vand.u32 %v1050, 65535
      %v1064 = vshrl.u32 %v1050, 16
      %v1065 = vcvt.s32.f32 %v1063
      %v1066 = vcvt.s32.f32 %v1064
      %1067 = vadd.xlane.f32.xlu0 %v1065
      %v1068 = vpop.xlane.xlu0 %1067
      %1069 = vadd.xlane.f32.xlu0 %v1066
      %v1070 = vpop.xlane.xlu0 %1069
      %v1071 = vcvt.f32.s32 %v1068
      %v1072 = vcvt.f32.s32 %v1070
      %v1073 = vshll.u32 %v1072, 16
      %v1074 = vadd.s32 %v1073, %v1071
      %vm1075 = vcmp.eq.s32.totalorder %v1062, %v756
      %vm1076 = vcmp.eq.s32.totalorder %v1074, %v757
      %v1077 = vsel %vm1075, 1, 0
      %v1078 = vsel %vm1076, 1, 0
      %v1079 = vcvt.s32.f32 %v1077
      %v1080 = vcvt.s32.f32 %v1078
      %v1081 = vmul.f32 %v679, %v1079
      %v1082 = vmul.f32 %v680, %v1080
      %v1083 = vsel %vm814, %v1081, 0.0
      %v1084 = vsel %vm814, %v1082, 0.0
      %v1085 = vadd.f32 %v1083, %v1084
      %v1086 = vrot.slane %v1085, 4
      %v1087 = vadd.f32 %v1085, %v1086
      %v1088 = vrot.slane %v1087, 2
      %v1089 = vadd.f32 %v1087, %v1088
      %v1090 = vrot.slane %v1089, 1
      %v1091 = vadd.f32 %v1089, %v1090
      %vm1092 = vcmp.eq.s32.totalorder %v756, 4
      %v1093 = vsel %vm1092, %v1091, %v1026
      %v1094 = vmax.f32 %v753, %v754
      %v1095 = vrot.slane %v1094, 4
      %v1096 = vmax.f32 %v1094, %v1095
      %v1097 = vrot.slane %v1096, 2
      %v1098 = vmax.f32 %v1096, %v1097
      %v1099 = vrot.slane %v1098, 1
      %v1100 = vmax.f32 %v1098, %v1099
      %vm1101 = vcmp.eq.f32.partialorder %v753, %v1100
      %vm1102 = vcmp.eq.f32.partialorder %v754, %v1100
      %v1103 = vsel %vm1101, %v756, 16
      %v1104 = vsel %vm1102, %v757, 16
      %vm1105 = vcmp.lt.s32.totalorder %v1103, %v1104
      %v1106 = vsel %vm1105, %v1103, %v1104
      %v1107 = vrot.slane %v1106, 4
      %vm1108 = vcmp.lt.s32.totalorder %v1106, %v1107
      %v1109 = vsel %vm1108, %v1106, %v1107
      %v1110 = vrot.slane %v1109, 2
      %vm1111 = vcmp.lt.s32.totalorder %v1109, %v1110
      %v1112 = vsel %vm1111, %v1109, %v1110
      %v1113 = vrot.slane %v1112, 1
      %vm1114 = vcmp.lt.s32.totalorder %v1112, %v1113
      %v1115 = vsel %vm1114, %v1112, %v1113
      %v1116 = vsel %vm741, %v1115, 0
      %v1117 = vsel %vm742, %v1115, 0
      %v1118 = vand.u32 %v1116, 65535
      %v1119 = vshrl.u32 %v1116, 16
      %v1120 = vcvt.s32.f32 %v1118
      %v1121 = vcvt.s32.f32 %v1119
      %1122 = vadd.xlane.f32.xlu0 %v1120
      %v1123 = vpop.xlane.xlu0 %1122
      %1124 = vadd.xlane.f32.xlu0 %v1121
      %v1125 = vpop.xlane.xlu0 %1124
      %v1126 = vcvt.f32.s32 %v1123
      %v1127 = vcvt.f32.s32 %v1125
      %v1128 = vshll.u32 %v1127, 16
      %v1129 = vadd.s32 %v1128, %v1126
      %v1130 = vand.u32 %v1117, 65535
      %v1131 = vshrl.u32 %v1117, 16
      %v1132 = vcvt.s32.f32 %v1130
      %v1133 = vcvt.s32.f32 %v1131
      %1134 = vadd.xlane.f32.xlu0 %v1132
      %v1135 = vpop.xlane.xlu0 %1134
      %1136 = vadd.xlane.f32.xlu0 %v1133
      %v1137 = vpop.xlane.xlu0 %1136
      %v1138 = vcvt.f32.s32 %v1135
      %v1139 = vcvt.f32.s32 %v1137
      %v1140 = vshll.u32 %v1139, 16
      %v1141 = vadd.s32 %v1140, %v1138
      %vm1142 = vcmp.eq.s32.totalorder %v1129, %v756
      %vm1143 = vcmp.eq.s32.totalorder %v1141, %v757
      %v1144 = vsel %vm1142, 1, 0
      %v1145 = vsel %vm1143, 1, 0
      %v1146 = vcvt.s32.f32 %v1144
      %v1147 = vcvt.s32.f32 %v1145
      %v1148 = vmul.f32 %v681, %v1146
      %v1149 = vmul.f32 %v682, %v1147
      %v1150 = vsel %vm814, %v1148, 0.0
      %v1151 = vsel %vm814, %v1149, 0.0
      %v1152 = vadd.f32 %v1150, %v1151
      %v1153 = vrot.slane %v1152, 4
      %v1154 = vadd.f32 %v1152, %v1153
      %v1155 = vrot.slane %v1154, 2
      %v1156 = vadd.f32 %v1154, %v1155
      %v1157 = vrot.slane %v1156, 1
      %v1158 = vadd.f32 %v1156, %v1157
      %vm1159 = vcmp.eq.s32.totalorder %v756, 5
      %v1160 = vsel %vm1159, %v1158, %v1093
      %vm1161 = vcmask 21504
      %1162 = vst.msk [vmem:[%s161] sm:$0x3f] %vm1161, %v1160
      %p1163 = scmp.lt.s32.totalorder %s13, 1
      %s1164 = scalar_select %p1163, %s13, 1
      %s1165 = smul.addr %s1164, 8
      %s1166 = scalar_lea.vmem %s2, %s1165
      // Predicated region
      $region29: #{tpu_custom_call.1} parent=27 // pred_check
        %p1167 = pneg %p83
      $region30: #{tpu_custom_call.1} parent=27 // pred_check_branch
        %1169 = sbr.rel (%p1167) target = $region32
      $region31: #{tpu_custom_call.1} parent=27 // pred_region
        _
      $region32: #{tpu_custom_call.1} parent=27 // pred_fallthru
        _
    $region28: #{tpu_custom_call.1} parent=5 // pred_fallthru
      _
    %p1170 = scmp.le.s32.totalorder 2, %s8
    // Predicated region
    $region33: #{tpu_custom_call.1} parent=5 // pred_check
      %p1171 = pneg %p1170
    $region34: #{tpu_custom_call.1} parent=5 // pred_check_branch
      %1173 = sbr.rel (%p1171) target = $region36
    $region35: #{tpu_custom_call.1} parent=5 // pred_region
      %s1174 = ssub.s32 %s8, 2
      // Predicated region
      $region37: #{tpu_custom_call.1} parent=35 // pred_check
        %p1175 = pneg %p89
      $region38: #{tpu_custom_call.1} parent=35 // pred_check_branch
        %1177 = sbr.rel (%p1175) target = $region40
      $region39: #{tpu_custom_call.1} parent=35 // pred_region
        %p1178 = scmp.lt.s32.totalorder %s14, 1
        %s1179 = scalar_select %p1178, %s14, 1
        %s1180 = smul.addr %s1179, 8
        %s1181 = scalar_lea.vmem %s2, %s1180
      $region40: #{tpu_custom_call.1} parent=35 // pred_fallthru
        _
    $region36: #{tpu_custom_call.1} parent=5 // pred_fallthru
      _
  $region6: #{tpu_custom_call.1} parent=0 // loop_footer
    %s12 = sadd.s32 1, %s8
  $region7: #{tpu_custom_call.1} parent=0 // loop_footer_branch
    %7 = sbr.rel target = $region3
  $region8: #{tpu_custom_call.1} parent=0 // loop_exit
    _

</llo_original>
